<compile_context>
chip_gen: v7x
topology: tpu7x:2x2x1
jax: 0.10.0
libtpu: 0.0.40
codegen_flags: <defaults>
</compile_context>

<pallas_src>
import itertools
import math

import numpy as np
import jax
import jax.numpy as jnp
from jax.experimental import pallas as pl
from jax.experimental.pallas import tpu as pltpu

# ----------------------- hyper-parameters (small, deterministic) -------------
WINDOW_SIZE = (8, 8)
SHIFT_SIZE = (4, 4)
DIM = 32                      # channels
NUM_BLOCKS = 8
BLOCK_SIZE = DIM // NUM_BLOCKS
MLP_RATIO = 4.0
HIDDEN_SIZE_FACTOR = 1.0
HIDDEN_BS = int(BLOCK_SIZE * HIDDEN_SIZE_FACTOR)
SPECTRAL_HIDDEN = NUM_BLOCKS * HIDDEN_BS
MLP_HIDDEN = int(DIM * MLP_RATIO)
SPARSITY = 0.01
LN_EPS = 1e-5
LANE = 128                    # TPU lane width: tokens per grid step

# Offsets into the packed bias/scale column (see init_params / kernel).
_OFF_LN1G = 0
_OFF_LN1B = DIM
_OFF_LN2G = 2 * DIM
_OFF_LN2B = 3 * DIM
_OFF_SB1 = 4 * DIM                              # length 2*SPECTRAL_HIDDEN
_OFF_SB2 = _OFF_SB1 + 2 * SPECTRAL_HIDDEN       # length 2*DIM
_OFF_MB1 = _OFF_SB2 + 2 * DIM                   # length MLP_HIDDEN
_OFF_MB2 = _OFF_MB1 + MLP_HIDDEN                # length DIM
_VEC_LEN = _OFF_MB2 + DIM


# ----------------------- shared elementwise helpers --------------------------
def _gelu_tanh(x):
    # TODO(synk): PyTorch nn.GELU defaults to the exact erf form; tanh
    # approximation is used here (erf has no clean Mosaic lowering).
    c = 0.7978845608028654  # sqrt(2/pi)
    return 0.5 * x * (1.0 + jnp.tanh(c * (x + 0.044715 * x * x * x)))


def _softshrink(x, lam):
    return jnp.where(x > lam, x - lam, jnp.where(x < -lam, x + lam, jnp.zeros_like(x)))


def _layer_norm(v, g, b):
    """LayerNorm over the last axis (pure-JAX reference)."""
    mu = jnp.mean(v, axis=-1, keepdims=True)
    var = jnp.mean((v - mu) ** 2, axis=-1, keepdims=True)
    return (v - mu) * jax.lax.rsqrt(var + LN_EPS) * g + b


def _layer_norm_cols(v, g, b):
    """LayerNorm over the channel (sublane) axis.  v: (C, T), g/b: (C, 1)."""
    mu = jnp.mean(v, axis=0, keepdims=True)
    var = jnp.mean((v - mu) ** 2, axis=0, keepdims=True)
    return (v - mu) * jax.lax.rsqrt(var + LN_EPS) * g + b


# ----------------------- swin partition plumbing (plain JAX glue) ------------
def window_partition(x, window_sizes):
    b, *spatial, c = x.shape
    new_shape = [b]
    for w, s in zip(window_sizes, spatial):
        if s >= w:
            new_shape.extend([s // w, w])
        else:
            new_shape.extend([1, s])
    new_shape.append(c)
    x = x.reshape(new_shape)                       # (b, nh, wh, nw, ww, c)
    x = jnp.transpose(x, (0, 1, 3, 2, 4, 5))       # (b, nh, nw, wh, ww, c)
    recover_shape = x.shape
    windows = x.reshape((-1,) + x.shape[3:])       # (b*nh*nw, wh, ww, c)
    return windows, recover_shape


def window_reverse(windows, recover_shape):
    x = windows.reshape(recover_shape)             # (b, nh, nw, wh, ww, c)
    x = jnp.transpose(x, (0, 1, 3, 2, 4, 5))       # (b, nh, wh, nw, ww, c)
    b, nh, wh, nw, ww, c = x.shape
    return x.reshape(b, nh * wh, nw * ww, c)


def _create_slices(shape_, window_, shift_):
    if shape_ <= window_:
        window_ = shape_
        shift_ = 0
    slices_ = []
    if shift_ > 0:
        slices_.append(slice(0, shift_))
    rest = (shape_ - shift_) % window_
    if rest != 0:
        slices_.extend([slice(shift_, shape_ - rest), slice(shape_ - rest, None)])
    else:
        slices_.append(slice(shift_, None))
    return slices_


def block_partition(x, window_sizes, shift_sizes):
    spatial = x.shape[1:-1]
    slices = [_create_slices(s, w, sh)
              for s, w, sh in zip(spatial, window_sizes, shift_sizes)]
    blocks = []
    for index in itertools.product([slice(None)], *slices, [slice(None)]):
        y = x[index]
        if y.size > 0:
            windows, recover_shape = window_partition(y, window_sizes)
            blocks.append((windows, recover_shape, index))
    return blocks


# ----------------------- DFT matrices (rfft2 / irfft2 as matmuls) ------------
_DFT_CACHE = {}
_CHUNK_MAT_CACHE = {}


def _rfft2_np(H, W):
    """Dense real numpy matrices for ortho rfft2 / irfft2 of an (H, W) window.

    Forward F (real/imag), shape (M, N): X_flat = F @ x_flat.
    Inverse G (real/imag), shape (N, M): x_flat = Gr @ Zr - Gi @ Zi (includes
    the Hermitian-symmetry multiplicity, matching torch.fft.irfft2)."""
    key = (H, W)
    if key in _DFT_CACHE:
        return _DFT_CACHE[key]
    Wf = W // 2 + 1
    h = np.arange(H)
    w = np.arange(W)
    kh = np.arange(H)
    kw = np.arange(Wf)
    ph = np.exp(-2j * np.pi * np.outer(kh, h) / H)          # [kh, h]
    pw = np.exp(-2j * np.pi * np.outer(kw, w) / W)          # [kw, w]
    F = (ph[:, None, :, None] * pw[None, :, None, :]).reshape(H * Wf, H * W)
    F = F / np.sqrt(H * W)
    mult = np.full(Wf, 2.0)
    mult[0] = 1.0
    if W % 2 == 0:
        mult[W // 2] = 1.0
    qh = np.exp(2j * np.pi * np.outer(h, kh) / H)           # [h, kh]
    qw = np.exp(2j * np.pi * np.outer(w, kw) / W) * mult[None, :]   # [w, kw]
    G = (qh[:, None, :, None] * qw[None, :, None, :]).reshape(H * W, H * Wf)
    G = G / np.sqrt(H * W)
    mats = (F.real.astype(np.float32), F.imag.astype(np.float32),
            G.real.astype(np.float32), G.imag.astype(np.float32))
    _DFT_CACHE[key] = mats
    return mats


def _dft_chunk_mats(hw, ww, chunk):
    """Fused, bf16 DFT matrices for one chunk of `chunk // (hw*ww)` windows.

    Returns:
      fcat: (chunk, 2*chunk)  -> xn @ fcat = [Re | Im] modes (lane-concat,
            zero-padded to `chunk` modes each), block-diag over the windows.
      gcat: (2*chunk, chunk)  -> [o2r | o2i] @ gcat = irfft2 real output
            (rows are [GrT ; -GiT], padded modes are zero rows)."""
    key = (hw, ww, chunk)
    if key in _CHUNK_MAT_CACHE:
        return _CHUNK_MAT_CACHE[key]
    n_tok = hw * ww
    base = chunk // n_tok
    assert base * n_tok == chunk, "chunk must be a multiple of the window token count"
    fr, fi, gr, gi = _rfft2_np(hw, ww)            # F:(M, n_tok), G:(n_tok, M)
    m = fr.shape[0]
    assert base * m <= chunk                       # modes fit in the pad width
    eye = np.eye(base, dtype=np.float32)
    fcat = np.zeros((chunk, 2 * chunk), np.float32)
    fcat[:, :base * m] = np.kron(eye, fr.T)
    fcat[:, chunk:chunk + base * m] = np.kron(eye, fi.T)
    gcat = np.zeros((2 * chunk, chunk), np.float32)
    gcat[:base * m, :] = np.kron(eye, gr.T)
    gcat[chunk:chunk + base * m, :] = -np.kron(eye, gi.T)
    mats = (jnp.asarray(fcat, dtype=jnp.bfloat16),
            jnp.asarray(gcat, dtype=jnp.bfloat16))
    _CHUNK_MAT_CACHE[key] = mats
    return mats


# ----------------------- the Pallas kernel -----------------------------------
def _swin_afno_kernel(gid_ref, x_ref, fcat_ref, gcat_ref, w1_ref, w2_ref,
                      mw1_ref, mw2_ref, vec_ref, o_ref):
    """One grid step = one 128-token chunk of same-shape windows, transposed:
         x_ref / o_ref : (C, chunk)   (channels on sublanes, tokens on lanes)
    The chunk's DFT matrices were selected by the index_map via the
    scalar-prefetched group id, so the body itself is group-agnostic."""
    del gid_ref                               # consumed by the index_maps only
    chunk = x_ref.shape[1]

    x = x_ref[...].astype(jnp.float32)                              # (C, T)

    # packed per-feature constants (column vectors, broadcast along lanes)
    ln1_g = vec_ref[_OFF_LN1G:_OFF_LN1G + DIM, :]
    ln1_b = vec_ref[_OFF_LN1B:_OFF_LN1B + DIM, :]
    ln2_g = vec_ref[_OFF_LN2G:_OFF_LN2G + DIM, :]
    ln2_b = vec_ref[_OFF_LN2B:_OFF_LN2B + DIM, :]
    sb1 = vec_ref[_OFF_SB1:_OFF_SB1 + 2 * SPECTRAL_HIDDEN, :]
    sb2 = vec_ref[_OFF_SB2:_OFF_SB2 + 2 * DIM, :]
    mb1 = vec_ref[_OFF_MB1:_OFF_MB1 + MLP_HIDDEN, :]
    mb2 = vec_ref[_OFF_MB2:_OFF_MB2 + DIM, :]

    residual = x
    xn = _layer_norm_cols(x, ln1_g, ln1_b)                          # f32 VPU

    # --- AFNO2D spectral filter ----------------------------------------------
    # forward rfft2 of every window in the chunk: ONE bf16 matmul ([Re | Im])
    xf_cat = jnp.dot(xn.astype(jnp.bfloat16), fcat_ref[...],
                     preferred_element_type=jnp.float32)            # (C, 2T)
    xf = jnp.concatenate([xf_cat[:, :chunk], xf_cat[:, chunk:]], axis=0)  # (2C, T)

    # block-diagonal complex 2-layer MLP, fused into one real matmul per layer
    o1 = jnp.maximum(
        jnp.dot(w1_ref[...], xf.astype(jnp.bfloat16),
                preferred_element_type=jnp.float32) + sb1, 0.0)
    o2 = jnp.dot(w2_ref[...], o1.astype(jnp.bfloat16),
                 preferred_element_type=jnp.float32) + sb2
    o2 = _softshrink(o2, SPARSITY)                                  # (2C, T)

    # inverse rfft2 back to token space: ONE bf16 matmul (GrT stacked on -GiT)
    o2cat = jnp.concatenate([o2[:DIM, :], o2[DIM:, :]], axis=1)     # (C, 2T)
    filt = jnp.dot(o2cat.astype(jnp.bfloat16), gcat_ref[...],
                   preferred_element_type=jnp.float32)              # (C, T)

    x1 = filt + xn + residual          # AFNO2D adds its (normed) input; double_skip
    xn2 = _layer_norm_cols(x1, ln2_g, ln2_b)

    # --- channel MLP -----------------------------------------------------------
    h = _gelu_tanh(jnp.dot(mw1_ref[...], xn2.astype(jnp.bfloat16),
                           preferred_element_type=jnp.float32) + mb1)
    y = jnp.dot(mw2_ref[...], h.astype(jnp.bfloat16),
                preferred_element_type=jnp.float32) + mb2

    o_ref[...] = (y + x1).astype(o_ref.dtype)


# ----------------------- SwinAFNOBlock forward (Pallas version) --------------
def swin_afno_block_pallas(x, p):
    c = x.shape[-1]
    spatial = x.shape[1:-1]
    slices_per_axis = [_create_slices(s, w, sh)
                       for s, w, sh in zip(spatial, WINDOW_SIZE, SHIFT_SIZE)]

    # ---- static partition bookkeeping (pure index plumbing) ----
    pieces = []
    for ri, rs in enumerate(slices_per_axis[0]):
        for ci, cs in enumerate(slices_per_axis[1]):
            y = x[:, rs, cs, :]
            if y.size == 0:
                continue
            windows, recover_shape = window_partition(y, WINDOW_SIZE)
            pieces.append(dict(ri=ri, ci=ci, windows=windows,
                               recover=recover_shape, wshape=windows.shape[1:3]))

    group_shapes = []
    group_pieces = {}
    for pc in pieces:
        if pc["wshape"] not in group_shapes:
            group_shapes.append(pc["wshape"])
            group_pieces[pc["wshape"]] = []
        group_pieces[pc["wshape"]].append(pc)

    # common tokens-per-chunk: lcm of every group's minimal lane-dense size
    chunk = LANE
    for (hw, ww) in group_shapes:
        m = (hw * ww) * (LANE // math.gcd(hw * ww, LANE))
        chunk = chunk * m // math.gcd(chunk, m)

    # ---- pack every group's windows into one (C, total_tokens) slab ----
    x_cols, gids, group_meta = [], [], []
    fcat_list, gcat_list = [], []
    for g, wshape in enumerate(group_shapes):
        hw, ww = wshape
        n_tok = hw * ww
        items = group_pieces[wshape]
        wins = jnp.concatenate([it["windows"].reshape(-1, n_tok, c) for it in items],
                               axis=0)
        nwin = wins.shape[0]
        tokens = nwin * n_tok
        n_chunks = -(-tokens // chunk)
        flat = wins.reshape(tokens, c)
        if n_chunks * chunk > tokens:
            flat = jnp.pad(flat, ((0, n_chunks * chunk - tokens), (0, 0)))
        x_cols.append(flat.T)                                   # (C, n_chunks*chunk)
        gids.extend([g] * n_chunks)
        group_meta.append((wshape, nwin, n_chunks))
        fcat, gcat = _dft_chunk_mats(hw, ww, chunk)
        fcat_list.append(fcat)
        gcat_list.append(gcat)

    x_all = x_cols[0] if len(x_cols) == 1 else jnp.concatenate(x_cols, axis=1)
    total_chunks = len(gids)
    gid_arr = jnp.asarray(np.asarray(gids, np.int32))
    fcat_stack = jnp.stack(fcat_list, axis=0)    # (G, chunk, 2*chunk) bf16
    gcat_stack = jnp.stack(gcat_list, axis=0)    # (G, 2*chunk, chunk) bf16

    w1T, w2T, mw1T, mw2T, vec = p["w1T"], p["w2T"], p["mw1T"], p["mw2T"], p["vec"]

    out_t = pl.pallas_call(
        _swin_afno_kernel,
        out_shape=jax.ShapeDtypeStruct((c, total_chunks * chunk), x.dtype),
        grid_spec=pltpu.PrefetchScalarGridSpec(
            num_scalar_prefetch=1,
            grid=(total_chunks,),
            in_specs=[
                pl.BlockSpec((c, chunk), lambda i, gid: (0, i)),
                pl.BlockSpec((None, chunk, 2 * chunk), lambda i, gid: (gid[i], 0, 0)),
                pl.BlockSpec((None, 2 * chunk, chunk), lambda i, gid: (gid[i], 0, 0)),
                pl.BlockSpec(w1T.shape, lambda i, gid: (0, 0)),
                pl.BlockSpec(w2T.shape, lambda i, gid: (0, 0)),
                pl.BlockSpec(mw1T.shape, lambda i, gid: (0, 0)),
                pl.BlockSpec(mw2T.shape, lambda i, gid: (0, 0)),
                pl.BlockSpec(vec.shape, lambda i, gid: (0, 0)),
            ],
            out_specs=pl.BlockSpec((c, chunk), lambda i, gid: (0, i)),
        ),
        compiler_params=pltpu.CompilerParams(dimension_semantics=("parallel",)),
    )(gid_arr, x_all, fcat_stack, gcat_stack, w1T, w2T, mw1T, mw2T, vec)

    # ---- unpack & reassemble via concatenation (no scatter updates) ----
    out_pieces = {}
    col = 0
    for (wshape, nwin, n_chunks) in group_meta:
        hw, ww = wshape
        n_tok = hw * ww
        seg = out_t[:, col: col + n_chunks * chunk]
        col += n_chunks * chunk
        seg = seg.T[: nwin * n_tok].reshape(nwin, hw, ww, c)
        off = 0
        for it in group_pieces[wshape]:
            nw = it["windows"].shape[0]
            out_pieces[(it["ri"], it["ci"])] = window_reverse(seg[off: off + nw],
                                                              it["recover"])
            off += nw

    rows = []
    for ri in range(len(slices_per_axis[0])):
        parts = [out_pieces[(ri, ci)] for ci in range(len(slices_per_axis[1]))
                 if (ri, ci) in out_pieces]
        if not parts:
            continue
        rows.append(parts[0] if len(parts) == 1 else jnp.concatenate(parts, axis=2))
    return rows[0] if len(rows) == 1 else jnp.concatenate(rows, axis=1)


# ----------------------- parameter init (deterministic, synthetic) -----------
def init_params(key):
    ks = jax.random.split(key, 8)
    scale = 0.02
    w1 = scale * jax.random.normal(ks[0], (2, NUM_BLOCKS, BLOCK_SIZE, HIDDEN_BS), jnp.float32)
    b1 = scale * jax.random.normal(ks[1], (2, NUM_BLOCKS, HIDDEN_BS), jnp.float32)
    w2 = scale * jax.random.normal(ks[2], (2, NUM_BLOCKS, HIDDEN_BS, BLOCK_SIZE), jnp.float32)
    b2 = scale * jax.random.normal(ks[3], (2, NUM_BLOCKS, BLOCK_SIZE), jnp.float32)
    mw1 = scale * jax.random.normal(ks[4], (DIM, MLP_HIDDEN), jnp.float32)
    mb1 = scale * jax.random.normal(ks[5], (1, MLP_HIDDEN), jnp.float32)
    mw2 = scale * jax.random.normal(ks[6], (MLP_HIDDEN, DIM), jnp.float32)
    mb2 = scale * jax.random.normal(ks[7], (1, DIM), jnp.float32)
    g1 = jnp.ones((1, DIM), jnp.float32)
    be1 = jnp.zeros((1, DIM), jnp.float32)
    g2 = jnp.ones((1, DIM), jnp.float32)
    be2 = jnp.zeros((1, DIM), jnp.float32)

    def blockdiag(w):   # (nb, i, o) -> block-diagonal (nb*i, nb*o)
        nb, i, o = w.shape
        out = np.zeros((nb * i, nb * o), np.float32)
        for n in range(nb):
            out[n * i:(n + 1) * i, n * o:(n + 1) * o] = w[n]
        return out

    w1_np, b1_np, w2_np, b2_np = (np.asarray(a) for a in (w1, b1, w2, b2))
    w1r, w1i = blockdiag(w1_np[0]), blockdiag(w1_np[1])        # (C, H_tot)
    w2r, w2i = blockdiag(w2_np[0]), blockdiag(w2_np[1])        # (H_tot, C)
    # Fused real representation of the complex layers, transposed orientation:
    #   [o_r; o_i] = [[Wr^T, -Wi^T], [Wi^T, Wr^T]] @ [x_r; x_i]
    w1T = np.block([[w1r.T, -w1i.T], [w1i.T, w1r.T]]).astype(np.float32)   # (2H, 2C)
    w2T = np.block([[w2r.T, -w2i.T], [w2i.T, w2r.T]]).astype(np.float32)   # (2C, 2H)
    sb1 = np.concatenate([b1_np[0].reshape(-1), b1_np[1].reshape(-1)])     # (2H,)
    sb2 = np.concatenate([b2_np[0].reshape(-1), b2_np[1].reshape(-1)])     # (2C,)

    vec = np.concatenate([
        np.ones(DIM, np.float32), np.zeros(DIM, np.float32),    # ln1 gamma / beta
        np.ones(DIM, np.float32), np.zeros(DIM, np.float32),    # ln2 gamma / beta
        sb1.astype(np.float32), sb2.astype(np.float32),
        np.asarray(mb1).reshape(-1), np.asarray(mb2).reshape(-1),
    ]).astype(np.float32)
    assert vec.shape[0] == _VEC_LEN

    kernel_params = {
        "w1T": jnp.asarray(w1T, dtype=jnp.bfloat16),
        "w2T": jnp.asarray(w2T, dtype=jnp.bfloat16),
        "mw1T": jnp.asarray(np.asarray(mw1).T, dtype=jnp.bfloat16),   # (MLP_HIDDEN, DIM)
        "mw2T": jnp.asarray(np.asarray(mw2).T, dtype=jnp.bfloat16),   # (DIM, MLP_HIDDEN)
        "vec": jnp.asarray(vec.reshape(_VEC_LEN, 1)),                 # f32 (LN/bias math)
    }
    raw_params = {"w1": w1, "b1": b1, "w2": w2, "b2": b2,
                  "mw1": mw1, "mb1": mb1, "mw2": mw2, "mb2": mb2,
                  "g1": g1, "be1": be1, "g2": g2, "be2": be2}
    return kernel_params, raw_params


# ----------------------- pure-JAX reference (uses jnp.fft) -------------------
def _afno_block_ref(x, rp):
    b, h, w, c = x.shape
    residual = x
    xn = _layer_norm(x, rp["g1"], rp["be1"])
    xf = jnp.fft.rfft2(xn, axes=(1, 2), norm="ortho")
    xf = xf.reshape(b, h, w // 2 + 1, NUM_BLOCKS, BLOCK_SIZE)
    w1, b1, w2, b2 = rp["w1"], rp["b1"], rp["w2"], rp["b2"]
    o1r = jax.nn.relu(jnp.einsum("...ni,nio->...no", xf.real, w1[0])
                      - jnp.einsum("...ni,nio->...no", xf.imag, w1[1]) + b1[0])
    o1i = jax.nn.relu(jnp.einsum("...ni,nio->...no", xf.imag, w1[0])
                      + jnp.einsum("...ni,nio->...no", xf.real, w1[1]) + b1[1])
    o2r = (jnp.einsum("...no,noj->...nj", o1r, w2[0])
           - jnp.einsum("...no,noj->...nj", o1i, w2[1]) + b2[0])
    o2i = (jnp.einsum("...no,noj->...nj", o1i, w2[0])
           + jnp.einsum("...no,noj->...nj", o1r, w2[1]) + b2[1])
    o2r = _softshrink(o2r, SPARSITY)
    o2i = _softshrink(o2i, SPARSITY)
    z = (o2r + 1j * o2i).reshape(b, h, w // 2 + 1, c)
    filt = jnp.fft.irfft2(z, s=(h, w), axes=(1, 2), norm="ortho")
    x1 = filt + xn
    x1 = x1 + residual
    residual2 = x1
    xn2 = _layer_norm(x1, rp["g2"], rp["be2"])
    hdn = _gelu_tanh(xn2 @ rp["mw1"] + rp["mb1"])
    y = hdn @ rp["mw2"] + rp["mb2"]
    return y + residual2


def swin_afno_block_ref(x, raw_params):
    dest = jnp.zeros_like(x)
    for windows, recover_shape, index in block_partition(x, WINDOW_SIZE, SHIFT_SIZE):
        y = _afno_block_ref(windows, raw_params)
        y = window_reverse(y, recover_shape)
        dest = dest.at[index].set(y)
    return dest


# ----------------------- main -------------------------------------------------
if __name__ == "__main__":
    key = jax.random.PRNGKey(0)
    kernel_params, raw_params = init_params(key)

    x = jax.random.normal(jax.random.fold_in(key, 123), (2, 16, 16, DIM), jnp.float32)

    fwd = jax.jit(swin_afno_block_pallas)
    out = jax.block_until_ready(fwd(x, kernel_params))

    ref = swin_afno_block_ref(x, raw_params)
    np.testing.assert_allclose(np.asarray(out), np.asarray(ref), atol=3e-2, rtol=3e-2)

    print("KERNEL_OK")
</pallas_src>

<mosaic_0001>
module attributes {stable_mosaic.version = 11 : i64} {
  func.func @_swin_afno_kernel(%arg0: i32, %arg1: memref<4xi32, #tpu.memory_space<smem>>, %arg2: memref<32x128xf32, #tpu.memory_space<vmem>>, %arg3: memref<1x128x256xbf16, #tpu.memory_space<vmem>>, %arg4: memref<1x256x128xbf16, #tpu.memory_space<vmem>>, %arg5: memref<64x64xbf16, #tpu.memory_space<vmem>>, %arg6: memref<64x64xbf16, #tpu.memory_space<vmem>>, %arg7: memref<128x32xbf16, #tpu.memory_space<vmem>>, %arg8: memref<32x128xbf16, #tpu.memory_space<vmem>>, %arg9: memref<416x1xf32, #tpu.memory_space<vmem>>, %arg10: memref<32x128xf32, #tpu.memory_space<vmem>>) attributes {dimension_semantics = [#tpu.dimension_semantics<parallel>], iteration_bounds = array<i64: 4>, scalar_prefetch = 1 : i64, scratch_operands = 0 : i64, tpu.core_type = #tpu.core_type<tc>, window_params = [{transform_indices = @transform_0, window_bounds = array<i64: 32, 128>}, {transform_indices = @transform_1, window_bounds = array<i64: 1, 128, 256>}, {transform_indices = @transform_2, window_bounds = array<i64: 1, 256, 128>}, {pipeline_mode = #tpu.pipeline_mode<synchronous>, transform_indices = @transform_3, window_bounds = array<i64: 64, 64>}, {pipeline_mode = #tpu.pipeline_mode<synchronous>, transform_indices = @transform_4, window_bounds = array<i64: 64, 64>}, {pipeline_mode = #tpu.pipeline_mode<synchronous>, transform_indices = @transform_5, window_bounds = array<i64: 128, 32>}, {pipeline_mode = #tpu.pipeline_mode<synchronous>, transform_indices = @transform_6, window_bounds = array<i64: 32, 128>}, {pipeline_mode = #tpu.pipeline_mode<synchronous>, transform_indices = @transform_7, window_bounds = array<i64: 416, 1>}, {transform_indices = @transform_8, window_bounds = array<i64: 32, 128>}]} {
    %c0 = arith.constant 0 : index
    %c0_0 = arith.constant 0 : index
    %0 = vector.load %arg2[%c0, %c0_0] : memref<32x128xf32, #tpu.memory_space<vmem>>, vector<32x128xf32>
    %c0_1 = arith.constant 0 : index
    %c0_2 = arith.constant 0 : index
    %1 = vector.load %arg9[%c0_1, %c0_2] : memref<416x1xf32, #tpu.memory_space<vmem>>, vector<32x1xf32>
    %c32 = arith.constant 32 : index
    %c0_3 = arith.constant 0 : index
    %2 = vector.load %arg9[%c32, %c0_3] : memref<416x1xf32, #tpu.memory_space<vmem>>, vector<32x1xf32>
    %c64 = arith.constant 64 : index
    %c0_4 = arith.constant 0 : index
    %3 = vector.load %arg9[%c64, %c0_4] : memref<416x1xf32, #tpu.memory_space<vmem>>, vector<32x1xf32>
    %c96 = arith.constant 96 : index
    %c0_5 = arith.constant 0 : index
    %4 = vector.load %arg9[%c96, %c0_5] : memref<416x1xf32, #tpu.memory_space<vmem>>, vector<32x1xf32>
    %c128 = arith.constant 128 : index
    %c0_6 = arith.constant 0 : index
    %5 = vector.load %arg9[%c128, %c0_6] : memref<416x1xf32, #tpu.memory_space<vmem>>, vector<64x1xf32>
    %c192 = arith.constant 192 : index
    %c0_7 = arith.constant 0 : index
    %6 = vector.load %arg9[%c192, %c0_7] : memref<416x1xf32, #tpu.memory_space<vmem>>, vector<64x1xf32>
    %c256 = arith.constant 256 : index
    %c0_8 = arith.constant 0 : index
    %7 = vector.load %arg9[%c256, %c0_8] : memref<416x1xf32, #tpu.memory_space<vmem>>, vector<128x1xf32>
    %c384 = arith.constant 384 : index
    %c0_9 = arith.constant 0 : index
    %8 = vector.load %arg9[%c384, %c0_9] : memref<416x1xf32, #tpu.memory_space<vmem>>, vector<32x1xf32>
    %cst = arith.constant dense<0.000000e+00> : vector<128xf32>
    %9 = vector.multi_reduction <add>, %0, %cst [0] : vector<32x128xf32> to vector<128xf32>
    %10 = vector.shape_cast %9 : vector<128xf32> to vector<1x128xf32>
    %cst_10 = arith.constant 3.200000e+01 : f32
    %11 = vector.broadcast %cst_10 : f32 to vector<1x128xf32>
    %12 = arith.divf %10, %11 : vector<1x128xf32>
    %13 = vector.broadcast %12 : vector<1x128xf32> to vector<32x128xf32>
    %14 = arith.subf %0, %13 : vector<32x128xf32>
    %15 = arith.mulf %14, %14 : vector<32x128xf32>
    %cst_11 = arith.constant dense<0.000000e+00> : vector<128xf32>
    %16 = vector.multi_reduction <add>, %15, %cst_11 [0] : vector<32x128xf32> to vector<128xf32>
    %17 = vector.shape_cast %16 : vector<128xf32> to vector<1x128xf32>
    %cst_12 = arith.constant 3.200000e+01 : f32
    %18 = vector.broadcast %cst_12 : f32 to vector<1x128xf32>
    %19 = arith.divf %17, %18 : vector<1x128xf32>
    %20 = vector.broadcast %12 : vector<1x128xf32> to vector<32x128xf32>
    %21 = arith.subf %0, %20 : vector<32x128xf32>
    %cst_13 = arith.constant 9.99999974E-6 : f32
    %22 = vector.broadcast %cst_13 : f32 to vector<1x128xf32>
    %23 = arith.addf %19, %22 : vector<1x128xf32>
    %24 = math.rsqrt %23 : vector<1x128xf32>
    %25 = vector.broadcast %24 : vector<1x128xf32> to vector<32x128xf32>
    %26 = arith.mulf %21, %25 : vector<32x128xf32>
    %27 = vector.broadcast %1 : vector<32x1xf32> to vector<32x128xf32>
    %28 = arith.mulf %26, %27 : vector<32x128xf32>
    %29 = vector.broadcast %2 : vector<32x1xf32> to vector<32x128xf32>
    %30 = arith.addf %28, %29 : vector<32x128xf32>
    %31 = arith.truncf %30 : vector<32x128xf32> to vector<32x128xbf16>
    %c0_14 = arith.constant 0 : index
    %c0_15 = arith.constant 0 : index
    %c0_16 = arith.constant 0 : index
    %32 = vector.load %arg3[%c0_14, %c0_15, %c0_16] : memref<1x128x256xbf16, #tpu.memory_space<vmem>>, vector<1x128x256xbf16>
    %33 = vector.shape_cast %32 : vector<1x128x256xbf16> to vector<128x256xbf16>
    %cst_17 = arith.constant dense<0.000000e+00> : vector<32x256xf32>
    %34 = tpu.matmul %31, %33, %cst_17 {dimension_numbers = #tpu.dot_dimension_numbers<[1], [0], [0], [1], [0, 0, 1, 1], [], []>} : vector<32x128xbf16>, vector<128x256xbf16>, vector<32x256xf32> -> vector<32x256xf32>
    %35 = vector.extract_strided_slice %34 {offsets = [0, 0], sizes = [32, 128], strides = [1, 1]} : vector<32x256xf32> to vector<32x128xf32>
    %36 = vector.extract_strided_slice %34 {offsets = [0, 128], sizes = [32, 128], strides = [1, 1]} : vector<32x256xf32> to vector<32x128xf32>
    %37 = tpu.concatenate %35, %36 in 0 : vector<32x128xf32>, vector<32x128xf32> -> vector<64x128xf32>
    %c0_18 = arith.constant 0 : index
    %c0_19 = arith.constant 0 : index
    %38 = vector.load %arg5[%c0_18, %c0_19] : memref<64x64xbf16, #tpu.memory_space<vmem>>, vector<64x64xbf16>
    %39 = arith.truncf %37 : vector<64x128xf32> to vector<64x128xbf16>
    %cst_20 = arith.constant dense<0.000000e+00> : vector<64x128xf32>
    %40 = tpu.matmul %38, %39, %cst_20 {dimension_numbers = #tpu.dot_dimension_numbers<[1], [0], [0], [1], [0, 0, 1, 1], [], []>} : vector<64x64xbf16>, vector<64x128xbf16>, vector<64x128xf32> -> vector<64x128xf32>
    %41 = vector.broadcast %5 : vector<64x1xf32> to vector<64x128xf32>
    %42 = arith.addf %40, %41 : vector<64x128xf32>
    %cst_21 = arith.constant 0.000000e+00 : f32
    %43 = vector.broadcast %cst_21 : f32 to vector<64x128xf32>
    %44 = arith.maximumf %42, %43 : vector<64x128xf32>
    %c0_22 = arith.constant 0 : index
    %c0_23 = arith.constant 0 : index
    %45 = vector.load %arg6[%c0_22, %c0_23] : memref<64x64xbf16, #tpu.memory_space<vmem>>, vector<64x64xbf16>
    %46 = arith.truncf %44 : vector<64x128xf32> to vector<64x128xbf16>
    %cst_24 = arith.constant dense<0.000000e+00> : vector<64x128xf32>
    %47 = tpu.matmul %45, %46, %cst_24 {dimension_numbers = #tpu.dot_dimension_numbers<[1], [0], [0], [1], [0, 0, 1, 1], [], []>} : vector<64x64xbf16>, vector<64x128xbf16>, vector<64x128xf32> -> vector<64x128xf32>
    %48 = vector.broadcast %6 : vector<64x1xf32> to vector<64x128xf32>
    %49 = arith.addf %47, %48 : vector<64x128xf32>
    %cst_25 = arith.constant 0.00999999977 : f32
    %50 = vector.broadcast %cst_25 : f32 to vector<64x128xf32>
    %51 = arith.cmpf ogt, %49, %50 : vector<64x128xf32>
    %cst_26 = arith.constant 0.00999999977 : f32
    %52 = vector.broadcast %cst_26 : f32 to vector<64x128xf32>
    %53 = arith.subf %49, %52 : vector<64x128xf32>
    %cst_27 = arith.constant -0.00999999977 : f32
    %54 = vector.broadcast %cst_27 : f32 to vector<64x128xf32>
    %55 = arith.cmpf olt, %49, %54 : vector<64x128xf32>
    %cst_28 = arith.constant 0.00999999977 : f32
    %56 = vector.broadcast %cst_28 : f32 to vector<64x128xf32>
    %57 = arith.addf %49, %56 : vector<64x128xf32>
    %cst_29 = arith.constant 0.000000e+00 : f32
    %58 = vector.broadcast %cst_29 : f32 to vector<64x128xf32>
    %59 = arith.select %55, %57, %58 : vector<64x128xi1>, vector<64x128xf32>
    %60 = arith.select %51, %53, %59 : vector<64x128xi1>, vector<64x128xf32>
    %61 = vector.extract_strided_slice %60 {offsets = [0, 0], sizes = [32, 128], strides = [1, 1]} : vector<64x128xf32> to vector<32x128xf32>
    %62 = vector.extract_strided_slice %60 {offsets = [32, 0], sizes = [32, 128], strides = [1, 1]} : vector<64x128xf32> to vector<32x128xf32>
    %63 = tpu.concatenate %61, %62 in 1 : vector<32x128xf32>, vector<32x128xf32> -> vector<32x256xf32>
    %64 = arith.truncf %63 : vector<32x256xf32> to vector<32x256xbf16>
    %c0_30 = arith.constant 0 : index
    %c0_31 = arith.constant 0 : index
    %c0_32 = arith.constant 0 : index
    %65 = vector.load %arg4[%c0_30, %c0_31, %c0_32] : memref<1x256x128xbf16, #tpu.memory_space<vmem>>, vector<1x256x128xbf16>
    %66 = vector.shape_cast %65 : vector<1x256x128xbf16> to vector<256x128xbf16>
    %cst_33 = arith.constant dense<0.000000e+00> : vector<32x128xf32>
    %67 = tpu.matmul %64, %66, %cst_33 {dimension_numbers = #tpu.dot_dimension_numbers<[1], [0], [0], [1], [0, 0, 1, 1], [], []>} : vector<32x256xbf16>, vector<256x128xbf16>, vector<32x128xf32> -> vector<32x128xf32>
    %68 = arith.addf %67, %30 : vector<32x128xf32>
    %69 = arith.addf %68, %0 : vector<32x128xf32>
    %cst_34 = arith.constant dense<0.000000e+00> : vector<128xf32>
    %70 = vector.multi_reduction <add>, %69, %cst_34 [0] : vector<32x128xf32> to vector<128xf32>
    %71 = vector.shape_cast %70 : vector<128xf32> to vector<1x128xf32>
    %cst_35 = arith.constant 3.200000e+01 : f32
    %72 = vector.broadcast %cst_35 : f32 to vector<1x128xf32>
    %73 = arith.divf %71, %72 : vector<1x128xf32>
    %74 = vector.broadcast %73 : vector<1x128xf32> to vector<32x128xf32>
    %75 = arith.subf %69, %74 : vector<32x128xf32>
    %76 = arith.mulf %75, %75 : vector<32x128xf32>
    %cst_36 = arith.constant dense<0.000000e+00> : vector<128xf32>
    %77 = vector.multi_reduction <add>, %76, %cst_36 [0] : vector<32x128xf32> to vector<128xf32>
    %78 = vector.shape_cast %77 : vector<128xf32> to vector<1x128xf32>
    %cst_37 = arith.constant 3.200000e+01 : f32
    %79 = vector.broadcast %cst_37 : f32 to vector<1x128xf32>
    %80 = arith.divf %78, %79 : vector<1x128xf32>
    %81 = vector.broadcast %73 : vector<1x128xf32> to vector<32x128xf32>
    %82 = arith.subf %69, %81 : vector<32x128xf32>
    %cst_38 = arith.constant 9.99999974E-6 : f32
    %83 = vector.broadcast %cst_38 : f32 to vector<1x128xf32>
    %84 = arith.addf %80, %83 : vector<1x128xf32>
    %85 = math.rsqrt %84 : vector<1x128xf32>
    %86 = vector.broadcast %85 : vector<1x128xf32> to vector<32x128xf32>
    %87 = arith.mulf %82, %86 : vector<32x128xf32>
    %88 = vector.broadcast %3 : vector<32x1xf32> to vector<32x128xf32>
    %89 = arith.mulf %87, %88 : vector<32x128xf32>
    %90 = vector.broadcast %4 : vector<32x1xf32> to vector<32x128xf32>
    %91 = arith.addf %89, %90 : vector<32x128xf32>
    %c0_39 = arith.constant 0 : index
    %c0_40 = arith.constant 0 : index
    %92 = vector.load %arg7[%c0_39, %c0_40] : memref<128x32xbf16, #tpu.memory_space<vmem>>, vector<128x32xbf16>
    %93 = arith.truncf %91 : vector<32x128xf32> to vector<32x128xbf16>
    %cst_41 = arith.constant dense<0.000000e+00> : vector<128x128xf32>
    %94 = tpu.matmul %92, %93, %cst_41 {dimension_numbers = #tpu.dot_dimension_numbers<[1], [0], [0], [1], [0, 0, 1, 1], [], []>} : vector<128x32xbf16>, vector<32x128xbf16>, vector<128x128xf32> -> vector<128x128xf32>
    %95 = vector.broadcast %7 : vector<128x1xf32> to vector<128x128xf32>
    %96 = arith.addf %94, %95 : vector<128x128xf32>
    %cst_42 = arith.constant 5.000000e-01 : f32
    %97 = vector.broadcast %cst_42 : f32 to vector<128x128xf32>
    %98 = arith.mulf %97, %96 : vector<128x128xf32>
    %cst_43 = arith.constant 4.471500e-02 : f32
    %99 = vector.broadcast %cst_43 : f32 to vector<128x128xf32>
    %100 = arith.mulf %99, %96 : vector<128x128xf32>
    %101 = arith.mulf %100, %96 : vector<128x128xf32>
    %102 = arith.mulf %101, %96 : vector<128x128xf32>
    %103 = arith.addf %96, %102 : vector<128x128xf32>
    %cst_44 = arith.constant 0.797884583 : f32
    %104 = vector.broadcast %cst_44 : f32 to vector<128x128xf32>
    %105 = arith.mulf %104, %103 : vector<128x128xf32>
    %106 = math.tanh %105 : vector<128x128xf32>
    %cst_45 = arith.constant 1.000000e+00 : f32
    %107 = vector.broadcast %cst_45 : f32 to vector<128x128xf32>
    %108 = arith.addf %107, %106 : vector<128x128xf32>
    %109 = arith.mulf %98, %108 : vector<128x128xf32>
    %c0_46 = arith.constant 0 : index
    %c0_47 = arith.constant 0 : index
    %110 = vector.load %arg8[%c0_46, %c0_47] : memref<32x128xbf16, #tpu.memory_space<vmem>>, vector<32x128xbf16>
    %111 = arith.truncf %109 : vector<128x128xf32> to vector<128x128xbf16>
    %cst_48 = arith.constant dense<0.000000e+00> : vector<32x128xf32>
    %112 = tpu.matmul %110, %111, %cst_48 {dimension_numbers = #tpu.dot_dimension_numbers<[1], [0], [0], [1], [0, 0, 1, 1], [], []>} : vector<32x128xbf16>, vector<128x128xbf16>, vector<32x128xf32> -> vector<32x128xf32>
    %113 = vector.broadcast %8 : vector<32x1xf32> to vector<32x128xf32>
    %114 = arith.addf %112, %113 : vector<32x128xf32>
    %115 = arith.addf %114, %69 : vector<32x128xf32>
    %c0_49 = arith.constant 0 : index
    %c0_50 = arith.constant 0 : index
    %116 = vector.load %arg10[%c0_49, %c0_50] : memref<32x128xf32, #tpu.memory_space<vmem>>, vector<32x128xf32>
    tpu.vector_store %arg10[%c0_49, %c0_50], %115 {strides = array<i32>} : memref<32x128xf32, #tpu.memory_space<vmem>>, vector<32x128xf32>,
    return
  }
  func.func @transform_0(%arg0: i32, %arg1: memref<4xi32, #tpu.memory_space<smem>>) -> (i32, i32) {
    %c0_i32 = arith.constant 0 : i32
    %c0_i32_0 = arith.constant 0 : i32
    return %c0_i32, %arg0 : i32, i32
  }
  func.func @transform_1(%arg0: i32, %arg1: memref<4xi32, #tpu.memory_space<smem>>) -> (i32, i32, i32) {
    %0 = arith.index_cast %arg0 : i32 to index
    %1 = memref.load %arg1[%0] : memref<4xi32, #tpu.memory_space<smem>>
    %c0_i32 = arith.constant 0 : i32
    %c0_i32_0 = arith.constant 0 : i32
    %c0_i32_1 = arith.constant 0 : i32
    return %1, %c0_i32, %c0_i32_0 : i32, i32, i32
  }
  func.func @transform_2(%arg0: i32, %arg1: memref<4xi32, #tpu.memory_space<smem>>) -> (i32, i32, i32) {
    %0 = arith.index_cast %arg0 : i32 to index
    %1 = memref.load %arg1[%0] : memref<4xi32, #tpu.memory_space<smem>>
    %c0_i32 = arith.constant 0 : i32
    %c0_i32_0 = arith.constant 0 : i32
    %c0_i32_1 = arith.constant 0 : i32
    return %1, %c0_i32, %c0_i32_0 : i32, i32, i32
  }
  func.func @transform_3(%arg0: i32, %arg1: memref<4xi32, #tpu.memory_space<smem>>) -> (i32, i32) {
    %c0_i32 = arith.constant 0 : i32
    %c0_i32_0 = arith.constant 0 : i32
    %c0_i32_1 = arith.constant 0 : i32
    return %c0_i32, %c0_i32_0 : i32, i32
  }
  func.func @transform_4(%arg0: i32, %arg1: memref<4xi32, #tpu.memory_space<smem>>) -> (i32, i32) {
    %c0_i32 = arith.constant 0 : i32
    %c0_i32_0 = arith.constant 0 : i32
    %c0_i32_1 = arith.constant 0 : i32
    return %c0_i32, %c0_i32_0 : i32, i32
  }
  func.func @transform_5(%arg0: i32, %arg1: memref<4xi32, #tpu.memory_space<smem>>) -> (i32, i32) {
    %c0_i32 = arith.constant 0 : i32
    %c0_i32_0 = arith.constant 0 : i32
    %c0_i32_1 = arith.constant 0 : i32
    return %c0_i32, %c0_i32_0 : i32, i32
  }
  func.func @transform_6(%arg0: i32, %arg1: memref<4xi32, #tpu.memory_space<smem>>) -> (i32, i32) {
    %c0_i32 = arith.constant 0 : i32
    %c0_i32_0 = arith.constant 0 : i32
    %c0_i32_1 = arith.constant 0 : i32
    return %c0_i32, %c0_i32_0 : i32, i32
  }
  func.func @transform_7(%arg0: i32, %arg1: memref<4xi32, #tpu.memory_space<smem>>) -> (i32, i32) {
    %c0_i32 = arith.constant 0 : i32
    %c0_i32_0 = arith.constant 0 : i32
    %c0_i32_1 = arith.constant 0 : i32
    return %c0_i32, %c0_i32_0 : i32, i32
  }
  func.func @transform_8(%arg0: i32, %arg1: memref<4xi32, #tpu.memory_space<smem>>) -> (i32, i32) {
    %c0_i32 = arith.constant 0 : i32
    %c0_i32_0 = arith.constant 0 : i32
    return %c0_i32, %arg0 : i32, i32
  }
}

</mosaic_0001>

<llo_original>
// kernel: swin_afno_block_pallas.1
$region0: #{swin_afno_block_pallas.1}
  #allocation0 [shape = 'u32[]', space=smem, size = 0x4, offset = 0x4, fixed_abs, tag = 'smem constant byte address 0x4 - core index']
  #allocation1 [shape = 'u32[144,128]{1,0:T(1,128)}', space=vmem, size = 0x12000, scoped, tag = 'internal scratch']
  #allocation2 [shape = 's32[1]{0}', space=sflag, size = 0x4, scoped, tag = 'scoped memory for swin_afno_block_pallas.1']
  #allocation3 [shape = 'u8[512]{0}', space=smem, size = 0x200, scoped, tag = 'prefetched SMEM operand 0']
  %s0 = inlined_call_operand.vmem [shape: s32[4], index: 0, kind: input, shape index: {}]
  %s1 = inlined_call_operand.vmem [shape: f32[32,512], index: 1, kind: input, shape index: {}]
  %s2 = inlined_call_operand.vmem [shape: bf16[4,128,256], index: 2, kind: input, shape index: {}]
  %s3 = inlined_call_operand.vmem [shape: bf16[4,256,128], index: 3, kind: input, shape index: {}]
  %s4 = inlined_call_operand.vmem [shape: bf16[64,64], index: 4, kind: input, shape index: {}]
  %s5 = inlined_call_operand.vmem [shape: bf16[64,64], index: 5, kind: input, shape index: {}]
  %s6 = inlined_call_operand.vmem [shape: bf16[128,32], index: 6, kind: input, shape index: {}]
  %s7 = inlined_call_operand.vmem [shape: bf16[32,128], index: 7, kind: input, shape index: {}]
  %s8 = inlined_call_operand.vmem [shape: f32[416,1], index: 8, kind: input, shape index: {}]
  %s9 = inlined_call_operand.vmem [shape: f32[32,512], index: 9, kind: output, shape index: {}]
  %s10 = sld [smem:[#allocation0]]
  $region137: #{swin_afno_block_pallas.1} parent=0
    _
  %s12 = ssub.s32 1, %s10
  %s13 = scalar_select 0, %s12, %s10
  %s14 = sshll.u32 %s0, 4
  %s15 = int_to_ptr.vmem [resolvable:$true] %s14
  %17 = dma.vmem_to_smem %s15, 16, [#allocation3], [#allocation2]
  %18 = dma.done [#allocation2], 16
  %19 = sfence
  $region1: #{swin_afno_block_pallas.1} parent=0
    #allocation4 [shape = 'u8[32768]{0}', space=vmem, size = 0x8000, scoped, tag = 'input window, operand 1']
    #allocation5 [shape = 'u8[32768]{0}', space=vmem, size = 0x8000, scoped, tag = 'output window, operand 0']
    loop: start=0, step=1, limit=6
    $region2: #{swin_afno_block_pallas.1} parent=1 // loop_pre_header
      _
    $region3: #{swin_afno_block_pallas.1} parent=1 // loop_header
      %s21 = sphi 0, %s25
      %p22 = scmp.ge.s32.totalorder %s21, 6
      %s31 = sphi 0, %s33
      %s34 = sphi 0, %s31
      %s35 = sphi 0, %s34
      %s51 = sphi 0, %s35
      %s59 = sphi 0, %s61
      %s62 = sphi 0, %s59
      %s63 = sphi 0, %s62
      %s79 = sphi 0, %s63
      %s87 = sphi 0, %s89
      %s90 = sphi 0, %s87
      %s91 = sphi 0, %s90
      %s107 = sphi 0, %s91
      %s111 = sphi 0, %s111
      %s113 = sphi 0, %s111
      %s114 = sphi 0, %s113
      %s128 = sphi 0, %s114
      %s132 = sphi 0, %s132
      %s134 = sphi 0, %s132
      %s135 = sphi 0, %s134
      %s149 = sphi 0, %s135
      %s153 = sphi 0, %s153
      %s155 = sphi 0, %s153
      %s156 = sphi 0, %s155
      %s170 = sphi 0, %s156
      %s174 = sphi 0, %s174
      %s176 = sphi 0, %s174
      %s177 = sphi 0, %s176
      %s191 = sphi 0, %s177
      %s195 = sphi 0, %s195
      %s197 = sphi 0, %s195
      %s198 = sphi 0, %s197
      %s212 = sphi 0, %s198
      %s218 = sphi 0, %s220
      %s221 = sphi 0, %s218
      %s222 = sphi 0, %s221
      %s238 = sphi 0, %s222
    $region4: #{swin_afno_block_pallas.1} parent=1 // loop_header_branch
      %24 = sbr.rel (%p22) target = $region8
    $region5: #{swin_afno_block_pallas.1} parent=1 // loop_body
      %s26 = ssub.s32 %s21, 1
      %s27 = ssub.s32 %s21, 2
      %s28 = sadd.s32 %s21, 1
      %s29 = ssub.s32 %s21, %s28
      %p30 = scmp.eq.s32.totalorder %s29, 0
      %s32 = sadd.s32 %s31, 1
      %s33 = scalar_select %p30, %s31, %s32
      %p36 = pneg %p30
      %p37 = scmp.eq.s32.totalorder %s21, 3
      %p38 = por %p36, %p37
      %p39 = scmp.ne.s32.totalorder %s31, %s34
      %p40 = scmp.eq.s32.totalorder %s21, 0
      %p41 = por %p39, %p40
      %p42 = scmp.ne.s32.totalorder %s31, %s34
      %p43 = scmp.eq.s32.totalorder %s26, 3
      %p44 = por %p42, %p43
      %p45 = scmp.ne.s32.totalorder %s34, %s35
      %p46 = scmp.eq.s32.totalorder %s26, 0
      %p47 = por %p45, %p46
      %p48 = scmp.ne.s32.totalorder %s34, %s35
      %p49 = scmp.eq.s32.totalorder %s27, 3
      %p50 = por %p48, %p49
      %p52 = scmp.ne.s32.totalorder %s35, %s51
      %p53 = scmp.eq.s32.totalorder %s27, 0
      %p54 = por %p52, %p53
      %s55 = sld [smem:[#allocation3 + %s21]]
      %s56 = sld [smem:[#allocation3 + %s28]]
      %s57 = ssub.s32 %s55, %s56
      %p58 = scmp.eq.s32.totalorder %s57, 0
      %s60 = sadd.s32 %s59, 1
      %s61 = scalar_select %p58, %s59, %s60
      %p64 = pneg %p58
      %p65 = scmp.eq.s32.totalorder %s21, 3
      %p66 = por %p64, %p65
      %p67 = scmp.ne.s32.totalorder %s59, %s62
      %p68 = scmp.eq.s32.totalorder %s21, 0
      %p69 = por %p67, %p68
      %p70 = scmp.ne.s32.totalorder %s59, %s62
      %p71 = scmp.eq.s32.totalorder %s26, 3
      %p72 = por %p70, %p71
      %p73 = scmp.ne.s32.totalorder %s62, %s63
      %p74 = scmp.eq.s32.totalorder %s26, 0
      %p75 = por %p73, %p74
      %p76 = scmp.ne.s32.totalorder %s62, %s63
      %p77 = scmp.eq.s32.totalorder %s27, 3
      %p78 = por %p76, %p77
      %p80 = scmp.ne.s32.totalorder %s63, %s79
      %p81 = scmp.eq.s32.totalorder %s27, 0
      %p82 = por %p80, %p81
      %s83 = sld [smem:[#allocation3 + %s21]]
      %s84 = sld [smem:[#allocation3 + %s28]]
      %s85 = ssub.s32 %s83, %s84
      %p86 = scmp.eq.s32.totalorder %s85, 0
      %s88 = sadd.s32 %s87, 1
      %s89 = scalar_select %p86, %s87, %s88
      %p92 = pneg %p86
      %p93 = scmp.eq.s32.totalorder %s21, 3
      %p94 = por %p92, %p93
      %p95 = scmp.ne.s32.totalorder %s87, %s90
      %p96 = scmp.eq.s32.totalorder %s21, 0
      %p97 = por %p95, %p96
      %p98 = scmp.ne.s32.totalorder %s87, %s90
      %p99 = scmp.eq.s32.totalorder %s26, 3
      %p100 = por %p98, %p99
      %p101 = scmp.ne.s32.totalorder %s90, %s91
      %p102 = scmp.eq.s32.totalorder %s26, 0
      %p103 = por %p101, %p102
      %p104 = scmp.ne.s32.totalorder %s90, %s91
      %p105 = scmp.eq.s32.totalorder %s27, 3
      %p106 = por %p104, %p105
      %p108 = scmp.ne.s32.totalorder %s91, %s107
      %p109 = scmp.eq.s32.totalorder %s27, 0
      %p110 = por %p108, %p109
      %s112 = sadd.s32 %s111, 1
      %p115 = scmp.eq.s32.totalorder %s21, 3
      %p116 = scmp.ne.s32.totalorder %s111, %s113
      %p117 = scmp.eq.s32.totalorder %s21, 0
      %p118 = por %p116, %p117
      %p119 = scmp.ne.s32.totalorder %s111, %s113
      %p120 = scmp.eq.s32.totalorder %s26, 3
      %p121 = por %p119, %p120
      %p122 = scmp.ne.s32.totalorder %s113, %s114
      %p123 = scmp.eq.s32.totalorder %s26, 0
      %p124 = por %p122, %p123
      %p125 = scmp.ne.s32.totalorder %s113, %s114
      %p126 = scmp.eq.s32.totalorder %s27, 3
      %p127 = por %p125, %p126
      %p129 = scmp.ne.s32.totalorder %s114, %s128
      %p130 = scmp.eq.s32.totalorder %s27, 0
      %p131 = por %p129, %p130
      %s133 = sadd.s32 %s132, 1
      %p136 = scmp.eq.s32.totalorder %s21, 3
      %p137 = scmp.ne.s32.totalorder %s132, %s134
      %p138 = scmp.eq.s32.totalorder %s21, 0
      %p139 = por %p137, %p138
      %p140 = scmp.ne.s32.totalorder %s132, %s134
      %p141 = scmp.eq.s32.totalorder %s26, 3
      %p142 = por %p140, %p141
      %p143 = scmp.ne.s32.totalorder %s134, %s135
      %p144 = scmp.eq.s32.totalorder %s26, 0
      %p145 = por %p143, %p144
      %p146 = scmp.ne.s32.totalorder %s134, %s135
      %p147 = scmp.eq.s32.totalorder %s27, 3
      %p148 = por %p146, %p147
      %p150 = scmp.ne.s32.totalorder %s135, %s149
      %p151 = scmp.eq.s32.totalorder %s27, 0
      %p152 = por %p150, %p151
      %s154 = sadd.s32 %s153, 1
      %p157 = scmp.eq.s32.totalorder %s21, 3
      %p158 = scmp.ne.s32.totalorder %s153, %s155
      %p159 = scmp.eq.s32.totalorder %s21, 0
      %p160 = por %p158, %p159
      %p161 = scmp.ne.s32.totalorder %s153, %s155
      %p162 = scmp.eq.s32.totalorder %s26, 3
      %p163 = por %p161, %p162
      %p164 = scmp.ne.s32.totalorder %s155, %s156
      %p165 = scmp.eq.s32.totalorder %s26, 0
      %p166 = por %p164, %p165
      %p167 = scmp.ne.s32.totalorder %s155, %s156
      %p168 = scmp.eq.s32.totalorder %s27, 3
      %p169 = por %p167, %p168
      %p171 = scmp.ne.s32.totalorder %s156, %s170
      %p172 = scmp.eq.s32.totalorder %s27, 0
      %p173 = por %p171, %p172
      %s175 = sadd.s32 %s174, 1
      %p178 = scmp.eq.s32.totalorder %s21, 3
      %p179 = scmp.ne.s32.totalorder %s174, %s176
      %p180 = scmp.eq.s32.totalorder %s21, 0
      %p181 = por %p179, %p180
      %p182 = scmp.ne.s32.totalorder %s174, %s176
      %p183 = scmp.eq.s32.totalorder %s26, 3
      %p184 = por %p182, %p183
      %p185 = scmp.ne.s32.totalorder %s176, %s177
      %p186 = scmp.eq.s32.totalorder %s26, 0
      %p187 = por %p185, %p186
      %p188 = scmp.ne.s32.totalorder %s176, %s177
      %p189 = scmp.eq.s32.totalorder %s27, 3
      %p190 = por %p188, %p189
      %p192 = scmp.ne.s32.totalorder %s177, %s191
      %p193 = scmp.eq.s32.totalorder %s27, 0
      %p194 = por %p192, %p193
      %s196 = sadd.s32 %s195, 1
      %p199 = scmp.eq.s32.totalorder %s21, 3
      %p200 = scmp.ne.s32.totalorder %s195, %s197
      %p201 = scmp.eq.s32.totalorder %s21, 0
      %p202 = por %p200, %p201
      %p203 = scmp.ne.s32.totalorder %s195, %s197
      %p204 = scmp.eq.s32.totalorder %s26, 3
      %p205 = por %p203, %p204
      %p206 = scmp.ne.s32.totalorder %s197, %s198
      %p207 = scmp.eq.s32.totalorder %s26, 0
      %p208 = por %p206, %p207
      %p209 = scmp.ne.s32.totalorder %s197, %s198
      %p210 = scmp.eq.s32.totalorder %s27, 3
      %p211 = por %p209, %p210
      %p213 = scmp.ne.s32.totalorder %s198, %s212
      %p214 = scmp.eq.s32.totalorder %s27, 0
      %p215 = por %p213, %p214
      %s216 = ssub.s32 %s21, %s28
      %p217 = scmp.eq.s32.totalorder %s216, 0
      %s219 = sadd.s32 %s218, 1
      %s220 = scalar_select %p217, %s218, %s219
      %p223 = pneg %p217
      %p224 = scmp.eq.s32.totalorder %s21, 3
      %p225 = por %p223, %p224
      %p226 = scmp.ne.s32.totalorder %s218, %s221
      %p227 = scmp.eq.s32.totalorder %s21, 0
      %p228 = por %p226, %p227
      %p229 = scmp.ne.s32.totalorder %s218, %s221
      %p230 = scmp.eq.s32.totalorder %s26, 3
      %p231 = por %p229, %p230
      %p232 = scmp.ne.s32.totalorder %s221, %s222
      %p233 = scmp.eq.s32.totalorder %s26, 0
      %p234 = por %p232, %p233
      %p235 = scmp.ne.s32.totalorder %s221, %s222
      %p236 = scmp.eq.s32.totalorder %s27, 3
      %p237 = por %p235, %p236
      %p239 = scmp.ne.s32.totalorder %s222, %s238
      %p240 = scmp.eq.s32.totalorder %s27, 0
      %p241 = por %p239, %p240
      %p242 = scmp.le.s32.totalorder 1, %s21
      %p243 = scmp.lt.s32.totalorder %s21, 5
      %p244 = pnand %p242, %p243
      %p245 = pneg %p244
      // Predicated region
      $region9: #{swin_afno_block_pallas.1} parent=5 // pred_check
        _
      $region10: #{swin_afno_block_pallas.1} parent=5 // pred_check_branch
        %247 = sbr.rel (%p244) target = $region12
      $region11: #{swin_afno_block_pallas.1} parent=5 // pred_region
        %s248 = ssub.s32 %s21, 1
        // Predicated region
        $region13: #{swin_afno_block_pallas.1} parent=11 // pred_check
          %p249 = pneg %p124
        $region14: #{swin_afno_block_pallas.1} parent=11 // pred_check_branch
          %251 = sbr.rel (%p249) target = $region16
        $region15: #{swin_afno_block_pallas.1} parent=11 // pred_region
          _
        $region16: #{swin_afno_block_pallas.1} parent=11 // pred_fallthru
          _
        // Predicated region
        $region17: #{swin_afno_block_pallas.1} parent=11 // pred_check
          %p252 = pneg %p145
        $region18: #{swin_afno_block_pallas.1} parent=11 // pred_check_branch
          %254 = sbr.rel (%p252) target = $region20
        $region19: #{swin_afno_block_pallas.1} parent=11 // pred_region
          _
        $region20: #{swin_afno_block_pallas.1} parent=11 // pred_fallthru
          _
        // Predicated region
        $region21: #{swin_afno_block_pallas.1} parent=11 // pred_check
          %p255 = pneg %p166
        $region22: #{swin_afno_block_pallas.1} parent=11 // pred_check_branch
          %257 = sbr.rel (%p255) target = $region24
        $region23: #{swin_afno_block_pallas.1} parent=11 // pred_region
          _
        $region24: #{swin_afno_block_pallas.1} parent=11 // pred_fallthru
          _
        // Predicated region
        $region25: #{swin_afno_block_pallas.1} parent=11 // pred_check
          %p258 = pneg %p187
        $region26: #{swin_afno_block_pallas.1} parent=11 // pred_check_branch
          %260 = sbr.rel (%p258) target = $region28
        $region27: #{swin_afno_block_pallas.1} parent=11 // pred_region
          _
        $region28: #{swin_afno_block_pallas.1} parent=11 // pred_fallthru
          _
        // Predicated region
        $region29: #{swin_afno_block_pallas.1} parent=11 // pred_check
          %p261 = pneg %p208
        $region30: #{swin_afno_block_pallas.1} parent=11 // pred_check_branch
          %263 = sbr.rel (%p261) target = $region32
        $region31: #{swin_afno_block_pallas.1} parent=11 // pred_region
          _
        $region32: #{swin_afno_block_pallas.1} parent=11 // pred_fallthru
          _
      $region12: #{swin_afno_block_pallas.1} parent=5 // pred_fallthru
        _
      %p264 = scmp.lt.s32.totalorder %s21, 4
      // Predicated region
      $region33: #{swin_afno_block_pallas.1} parent=5 // pred_check
        %p265 = pneg %p264
      $region34: #{swin_afno_block_pallas.1} parent=5 // pred_check_branch
        %267 = sbr.rel (%p265) target = $region36
      $region35: #{swin_afno_block_pallas.1} parent=5 // pred_region
        // Predicated region
        $region37: #{swin_afno_block_pallas.1} parent=35 // pred_check
          %p268 = pneg %p41
        $region38: #{swin_afno_block_pallas.1} parent=35 // pred_check_branch
          %270 = sbr.rel (%p268) target = $region40
        $region39: #{swin_afno_block_pallas.1} parent=35 // pred_region
          %s271 = sand.u32 %s31, 1
          %s272 = sand.u32 %s31, 1
          %s273 = smul.addr %s272, 32
          %s274 = scalar_lea.vmem [#allocation4], %s273
          %s275 = smul.addr %s21, 8
          %s276 = scalar_lea.vmem %s1, %s275
          // Predicated region
          $region41: #{swin_afno_block_pallas.1} parent=39 // pred_check
            _
          $region42: #{swin_afno_block_pallas.1} parent=39 // pred_check_branch
            %278 = sbr.rel (0) target = $region44
          $region43: #{swin_afno_block_pallas.1} parent=39 // pred_region
            // Predicated region
            $region45: #{swin_afno_block_pallas.1} parent=43 // pred_check
              _
            $region46: #{swin_afno_block_pallas.1} parent=43 // pred_check_branch
              %280 = sbr.rel (0) target = $region48
            $region47: #{swin_afno_block_pallas.1} parent=43 // pred_region
              // Predicated region
              $region60: #{swin_afno_block_pallas.1} parent=47 // pred_check
                _
              $region61: #{swin_afno_block_pallas.1} parent=47 // pred_check_branch
                %301 = sbr.rel (0) target = $region63
              $region62: #{swin_afno_block_pallas.1} parent=47 // pred_region
                loop: start=0, step=1, limit=1
                $region64: #{swin_afno_block_pallas.1} parent=62 // loop_pre_header
                  _
                $region65: #{swin_afno_block_pallas.1} parent=62 // loop_header
                  %s303 = sphi 0, %s307
                  %p304 = scmp.ge.s32.totalorder %s303, 1
                  %s308 = sphi %s276, %s276
                  %s309 = sphi %s274, %s274
                $region66: #{swin_afno_block_pallas.1} parent=62 // loop_header_branch
                  %306 = sbr.rel (%p304) target = $region70
                $region67: #{swin_afno_block_pallas.1} parent=62 // loop_body
                  %v310 = vld [vmem:[%s308] sm:$0xff]
                  %311 = vst [vmem:[%s309] sm:$0xff] %v310
                  %v312 = vld [vmem:[%s308 + $0x20] sm:$0xff]
                  %313 = vst [vmem:[%s309 + $0x8] sm:$0xff] %v312
                  %v314 = vld [vmem:[%s308 + $0x40] sm:$0xff]
                  %315 = vst [vmem:[%s309 + $0x10] sm:$0xff] %v314
                  %v316 = vld [vmem:[%s308 + $0x60] sm:$0xff]
                  %317 = vst [vmem:[%s309 + $0x18] sm:$0xff] %v316
                $region68: #{swin_afno_block_pallas.1} parent=62 // loop_footer
                  %s307 = sadd.s32 1, %s303
                $region69: #{swin_afno_block_pallas.1} parent=62 // loop_footer_branch
                  %302 = sbr.rel target = $region65
                $region70: #{swin_afno_block_pallas.1} parent=62 // loop_exit
                  _
              $region63: #{swin_afno_block_pallas.1} parent=47 // pred_fallthru
                _
              // Predicated region
              $region71: #{swin_afno_block_pallas.1} parent=47 // pred_check
                _
              $region72: #{swin_afno_block_pallas.1} parent=47 // pred_check_branch
                %319 = sbr.rel target = $region74
              $region73: #{swin_afno_block_pallas.1} parent=47 // pred_region
                _
              $region74: #{swin_afno_block_pallas.1} parent=47 // pred_fallthru
                _
            $region48: #{swin_afno_block_pallas.1} parent=43 // pred_fallthru
              _
            // Predicated region
            $region49: #{swin_afno_block_pallas.1} parent=43 // pred_check
              _
            $region50: #{swin_afno_block_pallas.1} parent=43 // pred_check_branch
              %282 = sbr.rel target = $region52
            $region51: #{swin_afno_block_pallas.1} parent=43 // pred_region
              loop: start=0, step=1, limit=1
              $region53: #{swin_afno_block_pallas.1} parent=51 // loop_pre_header
                _
              $region54: #{swin_afno_block_pallas.1} parent=51 // loop_header
                %s285 = sphi 0, %s289
                %p286 = scmp.ge.s32.totalorder %s285, 1
                %s290 = sphi %s276, %s276
                %s291 = sphi %s274, %s274
              $region55: #{swin_afno_block_pallas.1} parent=51 // loop_header_branch
                %288 = sbr.rel (%p286) target = $region59
              $region56: #{swin_afno_block_pallas.1} parent=51 // loop_body
                %v292 = vld [vmem:[%s290] sm:$0xff]
                %293 = vst [vmem:[%s291] sm:$0xff] %v292
                %v294 = vld [vmem:[%s290 + $0x20] sm:$0xff]
                %295 = vst [vmem:[%s291 + $0x8] sm:$0xff] %v294
                %v296 = vld [vmem:[%s290 + $0x40] sm:$0xff]
                %297 = vst [vmem:[%s291 + $0x10] sm:$0xff] %v296
                %v298 = vld [vmem:[%s290 + $0x60] sm:$0xff]
                %299 = vst [vmem:[%s291 + $0x18] sm:$0xff] %v298
              $region57: #{swin_afno_block_pallas.1} parent=51 // loop_footer
                %s289 = sadd.s32 1, %s285
              $region58: #{swin_afno_block_pallas.1} parent=51 // loop_footer_branch
                %284 = sbr.rel target = $region54
              $region59: #{swin_afno_block_pallas.1} parent=51 // loop_exit
                _
            $region52: #{swin_afno_block_pallas.1} parent=43 // pred_fallthru
              _
          $region44: #{swin_afno_block_pallas.1} parent=39 // pred_fallthru
            _
          %320 = vnop
        $region40: #{swin_afno_block_pallas.1} parent=35 // pred_fallthru
          _
        // Predicated region
        $region75: #{swin_afno_block_pallas.1} parent=35 // pred_check
          %p321 = pneg %p69
        $region76: #{swin_afno_block_pallas.1} parent=35 // pred_check_branch
          %323 = sbr.rel (%p321) target = $region78
        $region77: #{swin_afno_block_pallas.1} parent=35 // pred_region
          %s324 = sld [smem:[#allocation3 + %s21]]
          %p325 = scmp.lt.s32.totalorder %s324, 3
          %s326 = scalar_select %p325, %s324, 3
          %s327 = smul.addr %s326, 32
          %s328 = smul.addr %s327, 4
          %s329 = scalar_lea.vmem %s2, %s328
          %s330 = sld [smem:[#allocation3 + %s21]]
        $region78: #{swin_afno_block_pallas.1} parent=35 // pred_fallthru
          _
        // Predicated region
        $region79: #{swin_afno_block_pallas.1} parent=35 // pred_check
          %p331 = pneg %p97
        $region80: #{swin_afno_block_pallas.1} parent=35 // pred_check_branch
          %333 = sbr.rel (%p331) target = $region82
        $region81: #{swin_afno_block_pallas.1} parent=35 // pred_region
          %s334 = sld [smem:[#allocation3 + %s21]]
          %p335 = scmp.lt.s32.totalorder %s334, 3
          %s336 = scalar_select %p335, %s334, 3
          %s337 = smul.addr %s336, 32
          %s338 = smul.addr %s337, 4
          %s339 = scalar_lea.vmem %s3, %s338
          %s340 = sld [smem:[#allocation3 + %s21]]
        $region82: #{swin_afno_block_pallas.1} parent=35 // pred_fallthru
          _
      $region36: #{swin_afno_block_pallas.1} parent=5 // pred_fallthru
        _
      %p341 = scmp.le.s32.totalorder 1, %s21
      %p342 = scmp.lt.s32.totalorder %s21, 5
      %p343 = pnand %p341, %p342
      %p344 = pneg %p343
      // Predicated region
      $region83: #{swin_afno_block_pallas.1} parent=5 // pred_check
        _
      $region84: #{swin_afno_block_pallas.1} parent=5 // pred_check_branch
        %346 = sbr.rel (%p343) target = $region86
      $region85: #{swin_afno_block_pallas.1} parent=5 // pred_region
        %s347 = ssub.s32 %s21, 1
        %s348 = sand.u32 %s34, 1
        %s349 = sand.u32 %s34, 1
        %s350 = smul.addr %s349, 32
        %s351 = scalar_lea.vmem [#allocation4], %s350
        // Predicated region
        $region87: #{swin_afno_block_pallas.1} parent=85 // pred_check
          %p352 = pneg %p47
        $region88: #{swin_afno_block_pallas.1} parent=85 // pred_check_branch
          %354 = sbr.rel (%p352) target = $region90
        $region89: #{swin_afno_block_pallas.1} parent=85 // pred_region
          _
        $region90: #{swin_afno_block_pallas.1} parent=85 // pred_fallthru
          _
        %s355 = sand.u32 %s34, 1
        %s356 = sand.u32 %s34, 1
        %s357 = smul.addr %s356, 32
        %s358 = scalar_lea.vmem [#allocation4], %s357
        %p359 = pneg %p47
        %p360 = pneg %p44
        %s361 = sld [smem:[#allocation3 + %s26]]
        %p362 = scmp.lt.s32.totalorder %s361, 3
        %s363 = scalar_select %p362, %s361, 3
        %s364 = smul.addr %s363, 32
        %s365 = smul.addr %s364, 4
        %s366 = scalar_lea.vmem %s2, %s365
        %p367 = pneg %p75
        %p368 = pneg %p72
        %s369 = sld [smem:[#allocation3 + %s26]]
        %p370 = scmp.lt.s32.totalorder %s369, 3
        %s371 = scalar_select %p370, %s369, 3
        %s372 = smul.addr %s371, 32
        %s373 = smul.addr %s372, 4
        %s374 = scalar_lea.vmem %s3, %s373
        %p375 = pneg %p103
        %p376 = pneg %p100
        %p377 = pneg %p124
        %p378 = pneg %p121
        %p379 = pneg %p145
        %p380 = pneg %p142
        %p381 = pneg %p166
        %p382 = pneg %p163
        %p383 = pneg %p187
        %p384 = pneg %p184
        %p385 = pneg %p208
        %p386 = pneg %p205
        %p387 = pneg %p234
        %p388 = pneg %p231
        %s389 = sand.u32 %s221, 1
        %s390 = sand.u32 %s221, 1
        %s391 = smul.addr %s390, 32
        %s392 = scalar_lea.vmem [#allocation5], %s391
        %s393 = sld [smem:[#allocation3 + %s26]]
        %p394 = scmp.lt.s32.totalorder %s393, 3
        %s395 = scalar_select %p394, %s393, 3
        %s396 = smul.addr %s395, 32
        %s397 = smul.addr %s396, 4
        %s398 = scalar_lea.vmem %s2, %s397
        %s399 = sld [smem:[#allocation3 + %s26]]
        %s400 = sld [smem:[#allocation3 + %s26]]
        %p401 = scmp.lt.s32.totalorder %s400, 3
        %s402 = scalar_select %p401, %s400, 3
        %s403 = smul.addr %s402, 32
        %s404 = smul.addr %s403, 4
        %s405 = scalar_lea.vmem %s3, %s404
        %s406 = sld [smem:[#allocation3 + %s26]]
        %v408 = vld [vmem:[%s351] sm:$0xff]
        %v409 = vld [vmem:[%s351 + $0x8] sm:$0xff]
        %v410 = vld [vmem:[%s351 + $0x10] sm:$0xff]
        %v411 = vld [vmem:[%s351 + $0x18] sm:$0xff]
        %v412 = vld [vmem:[%s8] sm:$0xff]
        %v413 = vld [vmem:[%s8 + $0x8] sm:$0xff]
        %v414 = vld [vmem:[%s8 + $0x10] sm:$0xff]
        %v415 = vld [vmem:[%s8 + $0x18] sm:$0xff]
        %v416 = vld [vmem:[%s8 + $0x20] sm:$0xff]
        %v417 = vld [vmem:[%s8 + $0x28] sm:$0xff]
        %v418 = vld [vmem:[%s8 + $0x30] sm:$0xff]
        %v419 = vld [vmem:[%s8 + $0x38] sm:$0xff]
        %v420 = vld [vmem:[%s8 + $0x40] sm:$0xff]
        %v421 = vld [vmem:[%s8 + $0x48] sm:$0xff]
        %v422 = vld [vmem:[%s8 + $0x50] sm:$0xff]
        %v423 = vld [vmem:[%s8 + $0x58] sm:$0xff]
        %v424 = vld [vmem:[%s8 + $0x60] sm:$0xff]
        %v425 = vld [vmem:[%s8 + $0x68] sm:$0xff]
        %v426 = vld [vmem:[%s8 + $0x70] sm:$0xff]
        %v427 = vld [vmem:[%s8 + $0x78] sm:$0xff]
        %v428 = vld [vmem:[%s8 + $0x80] sm:$0xff]
        %v429 = vld [vmem:[%s8 + $0x88] sm:$0xff]
        %v430 = vld [vmem:[%s8 + $0x90] sm:$0xff]
        %v431 = vld [vmem:[%s8 + $0x98] sm:$0xff]
        %v432 = vld [vmem:[%s8 + $0xa0] sm:$0xff]
        %v433 = vld [vmem:[%s8 + $0xa8] sm:$0xff]
        %v434 = vld [vmem:[%s8 + $0xb0] sm:$0xff]
        %v435 = vld [vmem:[%s8 + $0xb8] sm:$0xff]
        %v436 = vld [vmem:[%s8 + $0xc0] sm:$0xff]
        %v437 = vld [vmem:[%s8 + $0xc8] sm:$0xff]
        %v438 = vld [vmem:[%s8 + $0xd0] sm:$0xff]
        %v439 = vld [vmem:[%s8 + $0xd8] sm:$0xff]
        %v440 = vld [vmem:[%s8 + $0xe0] sm:$0xff]
        %v441 = vld [vmem:[%s8 + $0xe8] sm:$0xff]
        %v442 = vld [vmem:[%s8 + $0xf0] sm:$0xff]
        %v443 = vld [vmem:[%s8 + $0xf8] sm:$0xff]
        %v444 = vld [vmem:[%s8 + $0x100] sm:$0xff]
        %v445 = vld [vmem:[%s8 + $0x108] sm:$0xff]
        %v446 = vld [vmem:[%s8 + $0x110] sm:$0xff]
        %v447 = vld [vmem:[%s8 + $0x118] sm:$0xff]
        %v448 = vld [vmem:[%s8 + $0x120] sm:$0xff]
        %v449 = vld [vmem:[%s8 + $0x128] sm:$0xff]
        %v450 = vld [vmem:[%s8 + $0x130] sm:$0xff]
        %v451 = vld [vmem:[%s8 + $0x138] sm:$0xff]
        %v452 = vld [vmem:[%s8 + $0x140] sm:$0xff]
        %v453 = vld [vmem:[%s8 + $0x148] sm:$0xff]
        %v454 = vld [vmem:[%s8 + $0x150] sm:$0xff]
        %v455 = vld [vmem:[%s8 + $0x158] sm:$0xff]
        %v456 = vld [vmem:[%s8 + $0x160] sm:$0xff]
        %v457 = vld [vmem:[%s8 + $0x168] sm:$0xff]
        %v458 = vld [vmem:[%s8 + $0x170] sm:$0xff]
        %v459 = vld [vmem:[%s8 + $0x178] sm:$0xff]
        %v460 = vld [vmem:[%s8 + $0x180] sm:$0xff]
        %v461 = vld [vmem:[%s8 + $0x188] sm:$0xff]
        %v462 = vld [vmem:[%s8 + $0x190] sm:$0xff]
        %v463 = vld [vmem:[%s8 + $0x198] sm:$0xff]
        %v464 = vadd.f32 %v408, %v409
        %v465 = vadd.f32 %v464, %v410
        %v466 = vadd.f32 %v465, %v411
        %v467 = vrot.slane %v466, 4
        %v468 = vadd.f32 %v466, %v467
        %v469 = vrot.slane %v468, 2
        %v470 = vadd.f32 %v468, %v469
        %v471 = vrot.slane %v470, 1
        %v472 = vadd.f32 %v470, %v471
        %v473 = vrcp.pop 32.0
        %v474 = vmul.f32 %v472, %v473
        %v475 = vsub.f32 %v408, %v474
        %v476 = vsub.f32 %v409, %v474
        %v477 = vsub.f32 %v410, %v474
        %v478 = vsub.f32 %v411, %v474
        %v479 = vmul.f32 %v475, %v475
        %v480 = vmul.f32 %v476, %v476
        %v481 = vmul.f32 %v477, %v477
        %v482 = vmul.f32 %v478, %v478
        %v483 = vadd.f32 %v479, %v480
        %v484 = vadd.f32 %v483, %v481
        %v485 = vadd.f32 %v484, %v482
        %v486 = vrot.slane %v485, 4
        %v487 = vadd.f32 %v485, %v486
        %v488 = vrot.slane %v487, 2
        %v489 = vadd.f32 %v487, %v488
        %v490 = vrot.slane %v489, 1
        %v491 = vadd.f32 %v489, %v490
        %v492 = vmul.f32 %v491, %v473
        %v493 = vadd.f32 %v492, 1e-05
        %v494 = vrsqrt.pop %v493
        %v495 = vmul.f32 %v475, %v494
        %v496 = vmul.f32 %v476, %v494
        %v497 = vmul.f32 %v477, %v494
        %v498 = vmul.f32 %v478, %v494
        %500 = vset.pattern.permute.xlu0 0
        %501 = vperm.xlu0 %500, %v412
        %v502 = vpop.permute.xlu0 %501
        %505 = vset.pattern.permute.xlu0 0
        %506 = vperm.xlu0 %505, %v413
        %v507 = vpop.permute.xlu0 %506
        %510 = vset.pattern.permute.xlu0 0
        %511 = vperm.xlu0 %510, %v414
        %v512 = vpop.permute.xlu0 %511
        %515 = vset.pattern.permute.xlu0 0
        %516 = vperm.xlu0 %515, %v415
        %v517 = vpop.permute.xlu0 %516
        %v519 = vmul.f32 %v495, %v502
        %v520 = vmul.f32 %v496, %v507
        %v521 = vmul.f32 %v497, %v512
        %v522 = vmul.f32 %v498, %v517
        %524 = vset.pattern.permute.xlu0 0
        %525 = vperm.xlu0 %524, %v416
        %v526 = vpop.permute.xlu0 %525
        %529 = vset.pattern.permute.xlu0 0
        %530 = vperm.xlu0 %529, %v417
        %v531 = vpop.permute.xlu0 %530
        %534 = vset.pattern.permute.xlu0 0
        %535 = vperm.xlu0 %534, %v418
        %v536 = vpop.permute.xlu0 %535
        %539 = vset.pattern.permute.xlu0 0
        %540 = vperm.xlu0 %539, %v419
        %v541 = vpop.permute.xlu0 %540
        %v543 = vadd.f32 %v519, %v526
        %v544 = vadd.f32 %v520, %v531
        %v545 = vadd.f32 %v521, %v536
        %v546 = vadd.f32 %v522, %v541
        %v547 = vpack.c.bf16 %v544, %v543
        %v548 = vpack.c.bf16 %v546, %v545
        %v549 = vld [vmem:[%s398] sm:$0xff]
        %v550 = vld [vmem:[%s398 + $0x8] sm:$0xff]
        %v551 = vld [vmem:[%s398 + $0x10] sm:$0xff]
        %v552 = vld [vmem:[%s398 + $0x18] sm:$0xff]
        %v553 = vld [vmem:[%s398 + $0x20] sm:$0xff]
        %v554 = vld [vmem:[%s398 + $0x28] sm:$0xff]
        %v555 = vld [vmem:[%s398 + $0x30] sm:$0xff]
        %v556 = vld [vmem:[%s398 + $0x38] sm:$0xff]
        %v557 = vld [vmem:[%s398 + $0x40] sm:$0xff]
        %v558 = vld [vmem:[%s398 + $0x48] sm:$0xff]
        %v559 = vld [vmem:[%s398 + $0x50] sm:$0xff]
        %v560 = vld [vmem:[%s398 + $0x58] sm:$0xff]
        %v561 = vld [vmem:[%s398 + $0x60] sm:$0xff]
        %v562 = vld [vmem:[%s398 + $0x68] sm:$0xff]
        %v563 = vld [vmem:[%s398 + $0x70] sm:$0xff]
        %v564 = vld [vmem:[%s398 + $0x78] sm:$0xff]
        %v581 = vunpack.c.l.b16 %v549
        %v582 = vunpack.c.h.b16 %v549
        %v583 = vunpack.c.l.b16 %v550
        %v584 = vunpack.c.h.b16 %v550
        %v585 = vunpack.c.l.b16 %v551
        %v586 = vunpack.c.h.b16 %v551
        %v587 = vunpack.c.l.b16 %v552
        %v588 = vunpack.c.h.b16 %v552
        %v589 = vunpack.c.l.b16 %v553
        %v590 = vunpack.c.h.b16 %v553
        %v591 = vunpack.c.l.b16 %v554
        %v592 = vunpack.c.h.b16 %v554
        %v593 = vunpack.c.l.b16 %v555
        %v594 = vunpack.c.h.b16 %v555
        %v595 = vunpack.c.l.b16 %v556
        %v596 = vunpack.c.h.b16 %v556
        %v597 = vunpack.c.l.b16 %v557
        %v598 = vunpack.c.h.b16 %v557
        %v599 = vunpack.c.l.b16 %v558
        %v600 = vunpack.c.h.b16 %v558
        %v601 = vunpack.c.l.b16 %v559
        %v602 = vunpack.c.h.b16 %v559
        %v603 = vunpack.c.l.b16 %v560
        %v604 = vunpack.c.h.b16 %v560
        %v605 = vunpack.c.l.b16 %v561
        %v606 = vunpack.c.h.b16 %v561
        %v607 = vunpack.c.l.b16 %v562
        %v608 = vunpack.c.h.b16 %v562
        %v609 = vunpack.c.l.b16 %v563
        %v610 = vunpack.c.h.b16 %v563
        %v611 = vunpack.c.l.b16 %v564
        %v612 = vunpack.c.h.b16 %v564
        %v613 = vpack.c.b16 %v583, %v581
        %v614 = vpack.c.b16 %v584, %v582
        %v615 = vpack.c.b16 %v587, %v585
        %v616 = vpack.c.b16 %v588, %v586
        %v617 = vpack.c.b16 %v591, %v589
        %v618 = vpack.c.b16 %v592, %v590
        %v619 = vpack.c.b16 %v595, %v593
        %v620 = vpack.c.b16 %v596, %v594
        %v621 = vpack.c.b16 %v599, %v597
        %v622 = vpack.c.b16 %v600, %v598
        %v623 = vpack.c.b16 %v603, %v601
        %v624 = vpack.c.b16 %v604, %v602
        %v625 = vpack.c.b16 %v607, %v605
        %v626 = vpack.c.b16 %v608, %v606
        %v627 = vpack.c.b16 %v611, %v609
        %v628 = vpack.c.b16 %v612, %v610
        %645 = vmatprep.subr.bf16.mxu0 %v614
        %646 = vmatpush1.bf16.msra.mxu0 %v613
        %647 = vmatprep.subr.bf16.mxu0 %v616
        %648 = vmatpush1.bf16.msra.mxu0 %v615
        %649 = vmatprep.subr.bf16.mxu0 %v618
        %650 = vmatpush1.bf16.msra.mxu0 %v617
        %651 = vmatprep.subr.bf16.mxu0 %v620
        %652 = vmatpush1.bf16.msra.mxu0 %v619
        %653 = vmatprep.subr.bf16.mxu0 %v622
        %654 = vmatpush1.bf16.msra.mxu0 %v621
        %655 = vmatprep.subr.bf16.mxu0 %v624
        %656 = vmatpush1.bf16.msra.mxu0 %v623
        %657 = vmatprep.subr.bf16.mxu0 %v626
        %658 = vmatpush1.bf16.msra.mxu0 %v625
        %659 = vmatprep.subr.bf16.mxu0 %v628
        %660 = vmatpush1.bf16.msra.mxu0 %v627
        %661 = vmatprep.subr.bf16.mxu0 0
        %662 = vmatpush1.bf16.msra.mxu0 0
        %663 = vmatprep.subr.bf16.mxu0 0
        %664 = vmatpush1.bf16.msra.mxu0 0
        %665 = vmatprep.subr.bf16.mxu0 0
        %666 = vmatpush1.bf16.msra.mxu0 0
        %667 = vmatprep.subr.bf16.mxu0 0
        %668 = vmatpush1.bf16.msra.mxu0 0
        %669 = vmatprep.subr.bf16.mxu0 0
        %670 = vmatpush1.bf16.msra.mxu0 0
        %671 = vmatprep.subr.bf16.mxu0 0
        %672 = vmatpush1.bf16.msra.mxu0 0
        %673 = vmatprep.subr.bf16.mxu0 0
        %674 = vmatpush1.bf16.msra.mxu0 0
        %675 = vmatprep.subr.bf16.mxu0 0
        %676 = vmatpush1.bf16.msra.mxu0 0
        %677 = vmatprep.mubr.bf16.mxu0 0
        %678 = vmatmul.mubr.bf16.gmra.mrb[0].mxu0 %v547
        %v679 = vpop.f32.mrb[0].mxu0
        %v680 = vadd.f32 0.0, %v679
        %v681 = vpop.f32.mrb[0].mxu0
        %v682 = vadd.f32 0.0, %v681
        %v683 = vpop.f32.mrb[0].mxu0
        %v684 = vadd.f32 0.0, %v683
        %v685 = vpop.f32.mrb[0].mxu0
        %v686 = vadd.f32 0.0, %v685
        %687 = vmatprep.mubr.bf16.mxu0 0
        %688 = vmatmul.mubr.bf16.gmra.mrb[0].mxu0 %v548
        %v689 = vpop.f32.mrb[0].mxu0
        %v690 = vadd.f32 0.0, %v689
        %v691 = vpop.f32.mrb[0].mxu0
        %v692 = vadd.f32 0.0, %v691
        %v693 = vpop.f32.mrb[0].mxu0
        %v694 = vadd.f32 0.0, %v693
        %v695 = vpop.f32.mrb[0].mxu0
        %v696 = vadd.f32 0.0, %v695
        %697 = vdwg.mxu0
        %v698 = vld [vmem:[%s4] sm:$0xf]
        %v699 = vld [vmem:[%s4 + $0x4] sm:$0xf]
        %v700 = vld [vmem:[%s4 + $0x8] sm:$0xf]
        %v701 = vld [vmem:[%s4 + $0xc] sm:$0xf]
        %v702 = vld [vmem:[%s4 + $0x10] sm:$0xf]
        %v703 = vld [vmem:[%s4 + $0x14] sm:$0xf]
        %v704 = vld [vmem:[%s4 + $0x18] sm:$0xf]
        %v705 = vld [vmem:[%s4 + $0x1c] sm:$0xf]
        %v706 = vpack.c.bf16 %v684, %v680
        %v707 = vpack.c.bf16 %v694, %v690
        %v708 = vpack.c.bf16 %v686, %v682
        %v709 = vpack.c.bf16 %v696, %v692
        %711 = vset.pattern.permute.xlu0 0
        %712 = vperm.xlu0 %711, %v428
        %v713 = vpop.permute.xlu0 %712
        %716 = vset.pattern.permute.xlu0 0
        %717 = vperm.xlu0 %716, %v429
        %v718 = vpop.permute.xlu0 %717
        %721 = vset.pattern.permute.xlu0 0
        %722 = vperm.xlu0 %721, %v430
        %v723 = vpop.permute.xlu0 %722
        %726 = vset.pattern.permute.xlu0 0
        %727 = vperm.xlu0 %726, %v431
        %v728 = vpop.permute.xlu0 %727
        %731 = vset.pattern.permute.xlu0 0
        %732 = vperm.xlu0 %731, %v432
        %v733 = vpop.permute.xlu0 %732
        %736 = vset.pattern.permute.xlu0 0
        %737 = vperm.xlu0 %736, %v433
        %v738 = vpop.permute.xlu0 %737
        %741 = vset.pattern.permute.xlu0 0
        %742 = vperm.xlu0 %741, %v434
        %v743 = vpop.permute.xlu0 %742
        %746 = vset.pattern.permute.xlu0 0
        %747 = vperm.xlu0 %746, %v435
        %v748 = vpop.permute.xlu0 %747
        %v758 = vunpack.c.l.b16 %v698
        %v759 = vunpack.c.l.b16 %v699
        %v760 = vunpack.c.l.b16 %v700
        %v761 = vunpack.c.l.b16 %v701
        %v762 = vunpack.c.l.b16 %v702
        %v763 = vunpack.c.l.b16 %v703
        %v764 = vunpack.c.l.b16 %v704
        %v765 = vunpack.c.l.b16 %v705
        %v766 = vpack.c.b16 %v759, %v758
        %v767 = vpack.c.b16 %v761, %v760
        %v768 = vpack.c.b16 %v763, %v762
        %v769 = vpack.c.b16 %v765, %v764
        %vm770 = vcmask 523264
        %v772 = vsel %vm770, %v766, 0
        %v775 = vsel %vm770, %v767, 0
        %v778 = vsel %vm770, %v768, 0
        %v781 = vsel %vm770, %v769, 0
        %783 = vmatprep.subr.bf16.mxu0 0
        %784 = vmatpush1.bf16.msra.mxu0 %v706
        %785 = vmatprep.subr.bf16.mxu0 0
        %786 = vmatpush1.bf16.msra.mxu0 %v707
        %787 = vmatprep.subr.bf16.mxu0 0
        %788 = vmatpush1.bf16.msra.mxu0 %v708
        %789 = vmatprep.subr.bf16.mxu0 0
        %790 = vmatpush1.bf16.msra.mxu0 %v709
        %791 = vmatprep.subr.bf16.mxu0 0
        %792 = vmatpush1.bf16.msra.mxu0 0
        %793 = vmatprep.subr.bf16.mxu0 0
        %794 = vmatpush1.bf16.msra.mxu0 0
        %795 = vmatprep.subr.bf16.mxu0 0
        %796 = vmatpush1.bf16.msra.mxu0 0
        %797 = vmatprep.subr.bf16.mxu0 0
        %798 = vmatpush1.bf16.msra.mxu0 0
        %799 = vmatprep.subr.bf16.mxu0 0
        %800 = vmatpush1.bf16.msra.mxu0 0
        %801 = vmatprep.subr.bf16.mxu0 0
        %802 = vmatpush1.bf16.msra.mxu0 0
        %803 = vmatprep.subr.bf16.mxu0 0
        %804 = vmatpush1.bf16.msra.mxu0 0
        %805 = vmatprep.subr.bf16.mxu0 0
        %806 = vmatpush1.bf16.msra.mxu0 0
        %807 = vmatprep.subr.bf16.mxu0 0
        %808 = vmatpush1.bf16.msra.mxu0 0
        %809 = vmatprep.subr.bf16.mxu0 0
        %810 = vmatpush1.bf16.msra.mxu0 0
        %811 = vmatprep.subr.bf16.mxu0 0
        %812 = vmatpush1.bf16.msra.mxu0 0
        %813 = vmatprep.subr.bf16.mxu0 0
        %814 = vmatpush1.bf16.msra.mxu0 0
        %815 = vmatprep.mubr.bf16.mxu0 0
        %816 = vmatmul.mubr.bf16.gmra.mrb[0].mxu0 %v772
        %v817 = vpop.f32.mrb[0].mxu0
        %v818 = vadd.f32 %v713, %v817
        %v819 = vpop.f32.mrb[0].mxu0
        %v820 = vpop.f32.mrb[0].mxu0
        %v821 = vadd.f32 %v718, %v820
        %v822 = vpop.f32.mrb[0].mxu0
        %823 = vmatprep.mubr.bf16.mxu0 0
        %824 = vmatmul.mubr.bf16.gmra.mrb[0].mxu0 %v775
        %v825 = vpop.f32.mrb[0].mxu0
        %v826 = vadd.f32 %v723, %v825
        %v827 = vpop.f32.mrb[0].mxu0
        %v828 = vpop.f32.mrb[0].mxu0
        %v829 = vadd.f32 %v728, %v828
        %v830 = vpop.f32.mrb[0].mxu0
        %831 = vmatprep.mubr.bf16.mxu0 0
        %832 = vmatmul.mubr.bf16.gmra.mrb[0].mxu0 %v778
        %v833 = vpop.f32.mrb[0].mxu0
        %v834 = vadd.f32 %v733, %v833
        %v835 = vpop.f32.mrb[0].mxu0
        %v836 = vpop.f32.mrb[0].mxu0
        %v837 = vadd.f32 %v738, %v836
        %v838 = vpop.f32.mrb[0].mxu0
        %839 = vmatprep.mubr.bf16.mxu0 0
        %840 = vmatmul.mubr.bf16.gmra.mrb[0].mxu0 %v781
        %v841 = vpop.f32.mrb[0].mxu0
        %v842 = vadd.f32 %v743, %v841
        %v843 = vpop.f32.mrb[0].mxu0
        %v844 = vpop.f32.mrb[0].mxu0
        %v845 = vadd.f32 %v748, %v844
        %v846 = vpop.f32.mrb[0].mxu0
        %847 = vdwg.mxu0
        %v848 = vmax.f32 %v818, 0.0
        %v849 = vmax.f32 %v821, 0.0
        %v850 = vmax.f32 %v826, 0.0
        %v851 = vmax.f32 %v829, 0.0
        %v852 = vmax.f32 %v834, 0.0
        %v853 = vmax.f32 %v837, 0.0
        %v854 = vmax.f32 %v842, 0.0
        %v855 = vmax.f32 %v845, 0.0
        %v856 = vld [vmem:[%s5] sm:$0xf]
        %v857 = vld [vmem:[%s5 + $0x4] sm:$0xf]
        %v858 = vld [vmem:[%s5 + $0x8] sm:$0xf]
        %v859 = vld [vmem:[%s5 + $0xc] sm:$0xf]
        %v860 = vld [vmem:[%s5 + $0x10] sm:$0xf]
        %v861 = vld [vmem:[%s5 + $0x14] sm:$0xf]
        %v862 = vld [vmem:[%s5 + $0x18] sm:$0xf]
        %v863 = vld [vmem:[%s5 + $0x1c] sm:$0xf]
        %v864 = vpack.c.bf16 %v849, %v848
        %v865 = vpack.c.bf16 %v851, %v850
        %v866 = vpack.c.bf16 %v853, %v852
        %v867 = vpack.c.bf16 %v855, %v854
        %869 = vset.pattern.permute.xlu0 0
        %870 = vperm.xlu0 %869, %v436
        %v871 = vpop.permute.xlu0 %870
        %874 = vset.pattern.permute.xlu0 0
        %875 = vperm.xlu0 %874, %v437
        %v876 = vpop.permute.xlu0 %875
        %879 = vset.pattern.permute.xlu0 0
        %880 = vperm.xlu0 %879, %v438
        %v881 = vpop.permute.xlu0 %880
        %884 = vset.pattern.permute.xlu0 0
        %885 = vperm.xlu0 %884, %v439
        %v886 = vpop.permute.xlu0 %885
        %889 = vset.pattern.permute.xlu0 0
        %890 = vperm.xlu0 %889, %v440
        %v891 = vpop.permute.xlu0 %890
        %894 = vset.pattern.permute.xlu0 0
        %895 = vperm.xlu0 %894, %v441
        %v896 = vpop.permute.xlu0 %895
        %899 = vset.pattern.permute.xlu0 0
        %900 = vperm.xlu0 %899, %v442
        %v901 = vpop.permute.xlu0 %900
        %904 = vset.pattern.permute.xlu0 0
        %905 = vperm.xlu0 %904, %v443
        %v906 = vpop.permute.xlu0 %905
        %v916 = vunpack.c.l.b16 %v856
        %v917 = vunpack.c.l.b16 %v857
        %v918 = vunpack.c.l.b16 %v858
        %v919 = vunpack.c.l.b16 %v859
        %v920 = vunpack.c.l.b16 %v860
        %v921 = vunpack.c.l.b16 %v861
        %v922 = vunpack.c.l.b16 %v862
        %v923 = vunpack.c.l.b16 %v863
        %v924 = vpack.c.b16 %v917, %v916
        %v925 = vpack.c.b16 %v919, %v918
        %v926 = vpack.c.b16 %v921, %v920
        %v927 = vpack.c.b16 %v923, %v922
        %v929 = vsel %vm770, %v924, 0
        %v932 = vsel %vm770, %v925, 0
        %v935 = vsel %vm770, %v926, 0
        %v938 = vsel %vm770, %v927, 0
        %940 = vmatprep.subr.bf16.mxu0 0
        %941 = vmatpush1.bf16.msra.mxu0 %v864
        %942 = vmatprep.subr.bf16.mxu0 0
        %943 = vmatpush1.bf16.msra.mxu0 %v865
        %944 = vmatprep.subr.bf16.mxu0 0
        %945 = vmatpush1.bf16.msra.mxu0 %v866
        %946 = vmatprep.subr.bf16.mxu0 0
        %947 = vmatpush1.bf16.msra.mxu0 %v867
        %948 = vmatprep.subr.bf16.mxu0 0
        %949 = vmatpush1.bf16.msra.mxu0 0
        %950 = vmatprep.subr.bf16.mxu0 0
        %951 = vmatpush1.bf16.msra.mxu0 0
        %952 = vmatprep.subr.bf16.mxu0 0
        %953 = vmatpush1.bf16.msra.mxu0 0
        %954 = vmatprep.subr.bf16.mxu0 0
        %955 = vmatpush1.bf16.msra.mxu0 0
        %956 = vmatprep.subr.bf16.mxu0 0
        %957 = vmatpush1.bf16.msra.mxu0 0
        %958 = vmatprep.subr.bf16.mxu0 0
        %959 = vmatpush1.bf16.msra.mxu0 0
        %960 = vmatprep.subr.bf16.mxu0 0
        %961 = vmatpush1.bf16.msra.mxu0 0
        %962 = vmatprep.subr.bf16.mxu0 0
        %963 = vmatpush1.bf16.msra.mxu0 0
        %964 = vmatprep.subr.bf16.mxu0 0
        %965 = vmatpush1.bf16.msra.mxu0 0
        %966 = vmatprep.subr.bf16.mxu0 0
        %967 = vmatpush1.bf16.msra.mxu0 0
        %968 = vmatprep.subr.bf16.mxu0 0
        %969 = vmatpush1.bf16.msra.mxu0 0
        %970 = vmatprep.subr.bf16.mxu0 0
        %971 = vmatpush1.bf16.msra.mxu0 0
        %972 = vmatprep.mubr.bf16.mxu0 0
        %973 = vmatmul.mubr.bf16.gmra.mrb[0].mxu0 %v929
        %v974 = vpop.f32.mrb[0].mxu0
        %v975 = vadd.f32 %v871, %v974
        %v976 = vpop.f32.mrb[0].mxu0
        %v977 = vpop.f32.mrb[0].mxu0
        %v978 = vadd.f32 %v876, %v977
        %v979 = vpop.f32.mrb[0].mxu0
        %980 = vmatprep.mubr.bf16.mxu0 0
        %981 = vmatmul.mubr.bf16.gmra.mrb[0].mxu0 %v932
        %v982 = vpop.f32.mrb[0].mxu0
        %v983 = vadd.f32 %v881, %v982
        %v984 = vpop.f32.mrb[0].mxu0
        %v985 = vpop.f32.mrb[0].mxu0
        %v986 = vadd.f32 %v886, %v985
        %v987 = vpop.f32.mrb[0].mxu0
        %988 = vmatprep.mubr.bf16.mxu0 0
        %989 = vmatmul.mubr.bf16.gmra.mrb[0].mxu0 %v935
        %v990 = vpop.f32.mrb[0].mxu0
        %v991 = vadd.f32 %v891, %v990
        %v992 = vpop.f32.mrb[0].mxu0
        %v993 = vpop.f32.mrb[0].mxu0
        %v994 = vadd.f32 %v896, %v993
        %v995 = vpop.f32.mrb[0].mxu0
        %996 = vmatprep.mubr.bf16.mxu0 0
        %997 = vmatmul.mubr.bf16.gmra.mrb[0].mxu0 %v938
        %v998 = vpop.f32.mrb[0].mxu0
        %v999 = vadd.f32 %v901, %v998
        %v1000 = vpop.f32.mrb[0].mxu0
        %v1001 = vpop.f32.mrb[0].mxu0
        %v1002 = vadd.f32 %v906, %v1001
        %v1003 = vpop.f32.mrb[0].mxu0
        %1004 = vdwg.mxu0
        %vm1005 = vcmp.gt.f32.partialorder %v975, 0.01
        %vm1006 = vcmp.gt.f32.partialorder %v978, 0.01
        %vm1007 = vcmp.gt.f32.partialorder %v983, 0.01
        %vm1008 = vcmp.gt.f32.partialorder %v986, 0.01
        %vm1009 = vcmp.gt.f32.partialorder %v991, 0.01
        %vm1010 = vcmp.gt.f32.partialorder %v994, 0.01
        %vm1011 = vcmp.gt.f32.partialorder %v999, 0.01
        %vm1012 = vcmp.gt.f32.partialorder %v1002, 0.01
        %v1013 = vsub.f32 %v975, 0.01
        %v1014 = vsub.f32 %v978, 0.01
        %v1015 = vsub.f32 %v983, 0.01
        %v1016 = vsub.f32 %v986, 0.01
        %v1017 = vsub.f32 %v991, 0.01
        %v1018 = vsub.f32 %v994, 0.01
        %v1019 = vsub.f32 %v999, 0.01
        %v1020 = vsub.f32 %v1002, 0.01
        %vm1021 = vcmp.lt.f32.partialorder %v975, -0.01
        %vm1022 = vcmp.lt.f32.partialorder %v978, -0.01
        %vm1023 = vcmp.lt.f32.partialorder %v983, -0.01
        %vm1024 = vcmp.lt.f32.partialorder %v986, -0.01
        %vm1025 = vcmp.lt.f32.partialorder %v991, -0.01
        %vm1026 = vcmp.lt.f32.partialorder %v994, -0.01
        %vm1027 = vcmp.lt.f32.partialorder %v999, -0.01
        %vm1028 = vcmp.lt.f32.partialorder %v1002, -0.01
        %v1029 = vadd.f32 %v975, 0.01
        %v1030 = vadd.f32 %v978, 0.01
        %v1031 = vadd.f32 %v983, 0.01
        %v1032 = vadd.f32 %v986, 0.01
        %v1033 = vadd.f32 %v991, 0.01
        %v1034 = vadd.f32 %v994, 0.01
        %v1035 = vadd.f32 %v999, 0.01
        %v1036 = vadd.f32 %v1002, 0.01
        %v1037 = vsel %vm1021, %v1029, 0.0
        %v1038 = vsel %vm1022, %v1030, 0.0
        %v1039 = vsel %vm1023, %v1031, 0.0
        %v1040 = vsel %vm1024, %v1032, 0.0
        %v1041 = vsel %vm1025, %v1033, 0.0
        %v1042 = vsel %vm1026, %v1034, 0.0
        %v1043 = vsel %vm1027, %v1035, 0.0
        %v1044 = vsel %vm1028, %v1036, 0.0
        %v1045 = vsel %vm1005, %v1013, %v1037
        %v1046 = vsel %vm1006, %v1014, %v1038
        %v1047 = vsel %vm1007, %v1015, %v1039
        %v1048 = vsel %vm1008, %v1016, %v1040
        %v1049 = vsel %vm1009, %v1017, %v1041
        %v1050 = vsel %vm1010, %v1018, %v1042
        %v1051 = vsel %vm1011, %v1019, %v1043
        %v1052 = vsel %vm1012, %v1020, %v1044
        %v1053 = vpack.c.bf16 %v1046, %v1045
        %v1054 = vpack.c.bf16 %v1050, %v1049
        %v1055 = vpack.c.bf16 %v1048, %v1047
        %v1056 = vpack.c.bf16 %v1052, %v1051
        %v1057 = vld [vmem:[%s405] sm:$0xf]
        %v1058 = vld [vmem:[%s405 + $0x4] sm:$0xf]
        %v1059 = vld [vmem:[%s405 + $0x8] sm:$0xf]
        %v1060 = vld [vmem:[%s405 + $0xc] sm:$0xf]
        %v1061 = vld [vmem:[%s405 + $0x10] sm:$0xf]
        %v1062 = vld [vmem:[%s405 + $0x14] sm:$0xf]
        %v1063 = vld [vmem:[%s405 + $0x18] sm:$0xf]
        %v1064 = vld [vmem:[%s405 + $0x1c] sm:$0xf]
        %v1065 = vld [vmem:[%s405 + $0x20] sm:$0xf]
        %v1066 = vld [vmem:[%s405 + $0x24] sm:$0xf]
        %v1067 = vld [vmem:[%s405 + $0x28] sm:$0xf]
        %v1068 = vld [vmem:[%s405 + $0x2c] sm:$0xf]
        %v1069 = vld [vmem:[%s405 + $0x30] sm:$0xf]
        %v1070 = vld [vmem:[%s405 + $0x34] sm:$0xf]
        %v1071 = vld [vmem:[%s405 + $0x38] sm:$0xf]
        %v1072 = vld [vmem:[%s405 + $0x3c] sm:$0xf]
        %v1073 = vld [vmem:[%s405 + $0x40] sm:$0xf]
        %v1074 = vld [vmem:[%s405 + $0x44] sm:$0xf]
        %v1075 = vld [vmem:[%s405 + $0x48] sm:$0xf]
        %v1076 = vld [vmem:[%s405 + $0x4c] sm:$0xf]
        %v1077 = vld [vmem:[%s405 + $0x50] sm:$0xf]
        %v1078 = vld [vmem:[%s405 + $0x54] sm:$0xf]
        %v1079 = vld [vmem:[%s405 + $0x58] sm:$0xf]
        %v1080 = vld [vmem:[%s405 + $0x5c] sm:$0xf]
        %v1081 = vld [vmem:[%s405 + $0x60] sm:$0xf]
        %v1082 = vld [vmem:[%s405 + $0x64] sm:$0xf]
        %v1083 = vld [vmem:[%s405 + $0x68] sm:$0xf]
        %v1084 = vld [vmem:[%s405 + $0x6c] sm:$0xf]
        %v1085 = vld [vmem:[%s405 + $0x70] sm:$0xf]
        %v1086 = vld [vmem:[%s405 + $0x74] sm:$0xf]
        %v1087 = vld [vmem:[%s405 + $0x78] sm:$0xf]
        %v1088 = vld [vmem:[%s405 + $0x7c] sm:$0xf]
        %v1121 = vunpack.c.l.b16 %v1057
        %v1122 = vunpack.c.l.b16 %v1058
        %v1123 = vunpack.c.l.b16 %v1059
        %v1124 = vunpack.c.l.b16 %v1060
        %v1125 = vunpack.c.l.b16 %v1061
        %v1126 = vunpack.c.l.b16 %v1062
        %v1127 = vunpack.c.l.b16 %v1063
        %v1128 = vunpack.c.l.b16 %v1064
        %v1129 = vunpack.c.l.b16 %v1065
        %v1130 = vunpack.c.l.b16 %v1066
        %v1131 = vunpack.c.l.b16 %v1067
        %v1132 = vunpack.c.l.b16 %v1068
        %v1133 = vunpack.c.l.b16 %v1069
        %v1134 = vunpack.c.l.b16 %v1070
        %v1135 = vunpack.c.l.b16 %v1071
        %v1136 = vunpack.c.l.b16 %v1072
        %v1137 = vunpack.c.l.b16 %v1073
        %v1138 = vunpack.c.l.b16 %v1074
        %v1139 = vunpack.c.l.b16 %v1075
        %v1140 = vunpack.c.l.b16 %v1076
        %v1141 = vunpack.c.l.b16 %v1077
        %v1142 = vunpack.c.l.b16 %v1078
        %v1143 = vunpack.c.l.b16 %v1079
        %v1144 = vunpack.c.l.b16 %v1080
        %v1145 = vunpack.c.l.b16 %v1081
        %v1146 = vunpack.c.l.b16 %v1082
        %v1147 = vunpack.c.l.b16 %v1083
        %v1148 = vunpack.c.l.b16 %v1084
        %v1149 = vunpack.c.l.b16 %v1085
        %v1150 = vunpack.c.l.b16 %v1086
        %v1151 = vunpack.c.l.b16 %v1087
        %v1152 = vunpack.c.l.b16 %v1088
        %v1153 = vpack.c.b16 %v1122, %v1121
        %v1154 = vpack.c.b16 %v1124, %v1123
        %v1155 = vpack.c.b16 %v1126, %v1125
        %v1156 = vpack.c.b16 %v1128, %v1127
        %v1157 = vpack.c.b16 %v1130, %v1129
        %v1158 = vpack.c.b16 %v1132, %v1131
        %v1159 = vpack.c.b16 %v1134, %v1133
        %v1160 = vpack.c.b16 %v1136, %v1135
        %v1161 = vpack.c.b16 %v1138, %v1137
        %v1162 = vpack.c.b16 %v1140, %v1139
        %v1163 = vpack.c.b16 %v1142, %v1141
        %v1164 = vpack.c.b16 %v1144, %v1143
        %v1165 = vpack.c.b16 %v1146, %v1145
        %v1166 = vpack.c.b16 %v1148, %v1147
        %v1167 = vpack.c.b16 %v1150, %v1149
        %v1168 = vpack.c.b16 %v1152, %v1151
        %1185 = vmatprep.subr.bf16.mxu0 0
        %1186 = vmatpush1.bf16.msra.mxu0 %v1153
        %1187 = vmatprep.subr.bf16.mxu0 0
        %1188 = vmatpush1.bf16.msra.mxu0 %v1154
        %1189 = vmatprep.subr.bf16.mxu0 0
        %1190 = vmatpush1.bf16.msra.mxu0 %v1155
        %1191 = vmatprep.subr.bf16.mxu0 0
        %1192 = vmatpush1.bf16.msra.mxu0 %v1156
        %1193 = vmatprep.subr.bf16.mxu0 0
        %1194 = vmatpush1.bf16.msra.mxu0 %v1157
        %1195 = vmatprep.subr.bf16.mxu0 0
        %1196 = vmatpush1.bf16.msra.mxu0 %v1158
        %1197 = vmatprep.subr.bf16.mxu0 0
        %1198 = vmatpush1.bf16.msra.mxu0 %v1159
        %1199 = vmatprep.subr.bf16.mxu0 0
        %1200 = vmatpush1.bf16.msra.mxu0 %v1160
        %1201 = vmatprep.subr.bf16.mxu0 0
        %1202 = vmatpush1.bf16.msra.mxu0 %v1161
        %1203 = vmatprep.subr.bf16.mxu0 0
        %1204 = vmatpush1.bf16.msra.mxu0 %v1162
        %1205 = vmatprep.subr.bf16.mxu0 0
        %1206 = vmatpush1.bf16.msra.mxu0 %v1163
        %1207 = vmatprep.subr.bf16.mxu0 0
        %1208 = vmatpush1.bf16.msra.mxu0 %v1164
        %1209 = vmatprep.subr.bf16.mxu0 0
        %1210 = vmatpush1.bf16.msra.mxu0 %v1165
        %1211 = vmatprep.subr.bf16.mxu0 0
        %1212 = vmatpush1.bf16.msra.mxu0 %v1166
        %1213 = vmatprep.subr.bf16.mxu0 0
        %1214 = vmatpush1.bf16.msra.mxu0 %v1167
        %1215 = vmatprep.subr.bf16.mxu0 0
        %1216 = vmatpush1.bf16.msra.mxu0 %v1168
        %1217 = vmatprep.mubr.bf16.mxu0 %v1054
        %1218 = vmatmul.mubr.bf16.gmra.mrb[0].mxu0 %v1053
        %v1219 = vpop.f32.mrb[0].mxu0
        %v1220 = vadd.f32 %v543, %v1219
        %v1221 = vpop.f32.mrb[0].mxu0
        %v1222 = vpop.f32.mrb[0].mxu0
        %v1223 = vadd.f32 %v544, %v1222
        %v1224 = vpop.f32.mrb[0].mxu0
        %1225 = vmatprep.mubr.bf16.mxu0 %v1056
        %1226 = vmatmul.mubr.bf16.gmra.mrb[0].mxu0 %v1055
        %v1227 = vpop.f32.mrb[0].mxu0
        %v1228 = vadd.f32 %v545, %v1227
        %v1229 = vpop.f32.mrb[0].mxu0
        %v1230 = vpop.f32.mrb[0].mxu0
        %v1231 = vadd.f32 %v546, %v1230
        %v1232 = vpop.f32.mrb[0].mxu0
        %1233 = vdwg.mxu0
        %v1234 = vadd.f32 %v1220, %v408
        %v1235 = vadd.f32 %v1223, %v409
        %v1236 = vadd.f32 %v1228, %v410
        %v1237 = vadd.f32 %v1231, %v411
        %v1238 = vadd.f32 %v1234, %v1235
        %v1239 = vadd.f32 %v1238, %v1236
        %v1240 = vadd.f32 %v1239, %v1237
        %v1241 = vrot.slane %v1240, 4
        %v1242 = vadd.f32 %v1240, %v1241
        %v1243 = vrot.slane %v1242, 2
        %v1244 = vadd.f32 %v1242, %v1243
        %v1245 = vrot.slane %v1244, 1
        %v1246 = vadd.f32 %v1244, %v1245
        %v1247 = vmul.f32 %v1246, %v473
        %v1248 = vsub.f32 %v1234, %v1247
        %v1249 = vsub.f32 %v1235, %v1247
        %v1250 = vsub.f32 %v1236, %v1247
        %v1251 = vsub.f32 %v1237, %v1247
        %v1252 = vmul.f32 %v1248, %v1248
        %v1253 = vmul.f32 %v1249, %v1249
        %v1254 = vmul.f32 %v1250, %v1250
        %v1255 = vmul.f32 %v1251, %v1251
        %v1256 = vadd.f32 %v1252, %v1253
        %v1257 = vadd.f32 %v1256, %v1254
        %v1258 = vadd.f32 %v1257, %v1255
        %v1259 = vrot.slane %v1258, 4
        %v1260 = vadd.f32 %v1258, %v1259
        %v1261 = vrot.slane %v1260, 2
        %v1262 = vadd.f32 %v1260, %v1261
        %v1263 = vrot.slane %v1262, 1
        %v1264 = vadd.f32 %v1262, %v1263
        %v1265 = vmul.f32 %v1264, %v473
        %v1266 = vadd.f32 %v1265, 1e-05
        %v1267 = vrsqrt.pop %v1266
        %v1268 = vmul.f32 %v1248, %v1267
        %v1269 = vmul.f32 %v1249, %v1267
        %v1270 = vmul.f32 %v1250, %v1267
        %v1271 = vmul.f32 %v1251, %v1267
        %1273 = vset.pattern.permute.xlu0 0
        %1274 = vperm.xlu0 %1273, %v420
        %v1275 = vpop.permute.xlu0 %1274
        %1278 = vset.pattern.permute.xlu0 0
        %1279 = vperm.xlu0 %1278, %v421
        %v1280 = vpop.permute.xlu0 %1279
        %1283 = vset.pattern.permute.xlu0 0
        %1284 = vperm.xlu0 %1283, %v422
        %v1285 = vpop.permute.xlu0 %1284
        %1288 = vset.pattern.permute.xlu0 0
        %1289 = vperm.xlu0 %1288, %v423
        %v1290 = vpop.permute.xlu0 %1289
        %v1292 = vmul.f32 %v1268, %v1275
        %v1293 = vmul.f32 %v1269, %v1280
        %v1294 = vmul.f32 %v1270, %v1285
        %v1295 = vmul.f32 %v1271, %v1290
        %1297 = vset.pattern.permute.xlu0 0
        %1298 = vperm.xlu0 %1297, %v424
        %v1299 = vpop.permute.xlu0 %1298
        %1302 = vset.pattern.permute.xlu0 0
        %1303 = vperm.xlu0 %1302, %v425
        %v1304 = vpop.permute.xlu0 %1303
        %1307 = vset.pattern.permute.xlu0 0
        %1308 = vperm.xlu0 %1307, %v426
        %v1309 = vpop.permute.xlu0 %1308
        %1312 = vset.pattern.permute.xlu0 0
        %1313 = vperm.xlu0 %1312, %v427
        %v1314 = vpop.permute.xlu0 %1313
        %v1316 = vadd.f32 %v1292, %v1299
        %v1317 = vadd.f32 %v1293, %v1304
        %v1318 = vadd.f32 %v1294, %v1309
        %v1319 = vadd.f32 %v1295, %v1314
        %v1320 = vld [vmem:[%s6] sm:$0xf]
        %v1321 = vld [vmem:[%s6 + $0x4] sm:$0xf]
        %v1322 = vld [vmem:[%s6 + $0x8] sm:$0xf]
        %v1323 = vld [vmem:[%s6 + $0xc] sm:$0xf]
        %v1324 = vld [vmem:[%s6 + $0x10] sm:$0xf]
        %v1325 = vld [vmem:[%s6 + $0x14] sm:$0xf]
        %v1326 = vld [vmem:[%s6 + $0x18] sm:$0xf]
        %v1327 = vld [vmem:[%s6 + $0x1c] sm:$0xf]
        %v1328 = vld [vmem:[%s6 + $0x20] sm:$0xf]
        %v1329 = vld [vmem:[%s6 + $0x24] sm:$0xf]
        %v1330 = vld [vmem:[%s6 + $0x28] sm:$0xf]
        %v1331 = vld [vmem:[%s6 + $0x2c] sm:$0xf]
        %v1332 = vld [vmem:[%s6 + $0x30] sm:$0xf]
        %v1333 = vld [vmem:[%s6 + $0x34] sm:$0xf]
        %v1334 = vld [vmem:[%s6 + $0x38] sm:$0xf]
        %v1335 = vld [vmem:[%s6 + $0x3c] sm:$0xf]
        %v1336 = vpack.c.bf16 %v1317, %v1316
        %v1337 = vpack.c.bf16 %v1319, %v1318
        %1339 = vset.pattern.permute.xlu0 0
        %1340 = vperm.xlu0 %1339, %v444
        %v1341 = vpop.permute.xlu0 %1340
        %1344 = vset.pattern.permute.xlu0 0
        %1345 = vperm.xlu0 %1344, %v445
        %v1346 = vpop.permute.xlu0 %1345
        %1349 = vset.pattern.permute.xlu0 0
        %1350 = vperm.xlu0 %1349, %v446
        %v1351 = vpop.permute.xlu0 %1350
        %1354 = vset.pattern.permute.xlu0 0
        %1355 = vperm.xlu0 %1354, %v447
        %v1356 = vpop.permute.xlu0 %1355
        %1359 = vset.pattern.permute.xlu0 0
        %1360 = vperm.xlu0 %1359, %v448
        %v1361 = vpop.permute.xlu0 %1360
        %1364 = vset.pattern.permute.xlu0 0
        %1365 = vperm.xlu0 %1364, %v449
        %v1366 = vpop.permute.xlu0 %1365
        %1369 = vset.pattern.permute.xlu0 0
        %1370 = vperm.xlu0 %1369, %v450
        %v1371 = vpop.permute.xlu0 %1370
        %1374 = vset.pattern.permute.xlu0 0
        %1375 = vperm.xlu0 %1374, %v451
        %v1376 = vpop.permute.xlu0 %1375
        %1379 = vset.pattern.permute.xlu0 0
        %1380 = vperm.xlu0 %1379, %v452
        %v1381 = vpop.permute.xlu0 %1380
        %1384 = vset.pattern.permute.xlu0 0
        %1385 = vperm.xlu0 %1384, %v453
        %v1386 = vpop.permute.xlu0 %1385
        %1389 = vset.pattern.permute.xlu0 0
        %1390 = vperm.xlu0 %1389, %v454
        %v1391 = vpop.permute.xlu0 %1390
        %1394 = vset.pattern.permute.xlu0 0
        %1395 = vperm.xlu0 %1394, %v455
        %v1396 = vpop.permute.xlu0 %1395
        %1399 = vset.pattern.permute.xlu0 0
        %1400 = vperm.xlu0 %1399, %v456
        %v1401 = vpop.permute.xlu0 %1400
        %1404 = vset.pattern.permute.xlu0 0
        %1405 = vperm.xlu0 %1404, %v457
        %v1406 = vpop.permute.xlu0 %1405
        %1409 = vset.pattern.permute.xlu0 0
        %1410 = vperm.xlu0 %1409, %v458
        %v1411 = vpop.permute.xlu0 %1410
        %1414 = vset.pattern.permute.xlu0 0
        %1415 = vperm.xlu0 %1414, %v459
        %v1416 = vpop.permute.xlu0 %1415
        %v1434 = vunpack.c.l.b16 %v1320
        %v1435 = vunpack.c.l.b16 %v1321
        %v1436 = vunpack.c.l.b16 %v1322
        %v1437 = vunpack.c.l.b16 %v1323
        %v1438 = vunpack.c.l.b16 %v1324
        %v1439 = vunpack.c.l.b16 %v1325
        %v1440 = vunpack.c.l.b16 %v1326
        %v1441 = vunpack.c.l.b16 %v1327
        %v1442 = vunpack.c.l.b16 %v1328
        %v1443 = vunpack.c.l.b16 %v1329
        %v1444 = vunpack.c.l.b16 %v1330
        %v1445 = vunpack.c.l.b16 %v1331
        %v1446 = vunpack.c.l.b16 %v1332
        %v1447 = vunpack.c.l.b16 %v1333
        %v1448 = vunpack.c.l.b16 %v1334
        %v1449 = vunpack.c.l.b16 %v1335
        %v1450 = vpack.c.b16 %v1435, %v1434
        %v1451 = vpack.c.b16 %v1437, %v1436
        %v1452 = vpack.c.b16 %v1439, %v1438
        %v1453 = vpack.c.b16 %v1441, %v1440
        %v1454 = vpack.c.b16 %v1443, %v1442
        %v1455 = vpack.c.b16 %v1445, %v1444
        %v1456 = vpack.c.b16 %v1447, %v1446
        %v1457 = vpack.c.b16 %v1449, %v1448
        %vm1458 = vcmask 261120
        %v1460 = vsel %vm1458, %v1450, 0
        %v1463 = vsel %vm1458, %v1451, 0
        %v1466 = vsel %vm1458, %v1452, 0
        %v1469 = vsel %vm1458, %v1453, 0
        %v1472 = vsel %vm1458, %v1454, 0
        %v1475 = vsel %vm1458, %v1455, 0
        %v1478 = vsel %vm1458, %v1456, 0
        %v1481 = vsel %vm1458, %v1457, 0
        %1483 = vmatprep.subr.bf16.mxu0 0
        %1484 = vmatpush1.bf16.msra.mxu0 %v1336
        %1485 = vmatprep.subr.bf16.mxu0 0
        %1486 = vmatpush1.bf16.msra.mxu0 %v1337
        %1487 = vmatprep.subr.bf16.mxu0 0
        %1488 = vmatpush1.bf16.msra.mxu0 0
        %1489 = vmatprep.subr.bf16.mxu0 0
        %1490 = vmatpush1.bf16.msra.mxu0 0
        %1491 = vmatprep.subr.bf16.mxu0 0
        %1492 = vmatpush1.bf16.msra.mxu0 0
        %1493 = vmatprep.subr.bf16.mxu0 0
        %1494 = vmatpush1.bf16.msra.mxu0 0
        %1495 = vmatprep.subr.bf16.mxu0 0
        %1496 = vmatpush1.bf16.msra.mxu0 0
        %1497 = vmatprep.subr.bf16.mxu0 0
        %1498 = vmatpush1.bf16.msra.mxu0 0
        %1499 = vmatprep.subr.bf16.mxu0 0
        %1500 = vmatpush1.bf16.msra.mxu0 0
        %1501 = vmatprep.subr.bf16.mxu0 0
        %1502 = vmatpush1.bf16.msra.mxu0 0
        %1503 = vmatprep.subr.bf16.mxu0 0
        %1504 = vmatpush1.bf16.msra.mxu0 0
        %1505 = vmatprep.subr.bf16.mxu0 0
        %1506 = vmatpush1.bf16.msra.mxu0 0
        %1507 = vmatprep.subr.bf16.mxu0 0
        %1508 = vmatpush1.bf16.msra.mxu0 0
        %1509 = vmatprep.subr.bf16.mxu0 0
        %1510 = vmatpush1.bf16.msra.mxu0 0
        %1511 = vmatprep.subr.bf16.mxu0 0
        %1512 = vmatpush1.bf16.msra.mxu0 0
        %1513 = vmatprep.subr.bf16.mxu0 0
        %1514 = vmatpush1.bf16.msra.mxu0 0
        %1515 = vmatprep.mubr.bf16.mxu0 0
        %1516 = vmatmul.mubr.bf16.gmra.mrb[0].mxu0 %v1460
        %v1517 = vpop.f32.mrb[0].mxu0
        %v1518 = vadd.f32 %v1341, %v1517
        %v1519 = vpop.f32.mrb[0].mxu0
        %v1520 = vpop.f32.mrb[0].mxu0
        %v1521 = vadd.f32 %v1346, %v1520
        %v1522 = vpop.f32.mrb[0].mxu0
        %1523 = vmatprep.mubr.bf16.mxu0 0
        %1524 = vmatmul.mubr.bf16.gmra.mrb[0].mxu0 %v1463
        %v1525 = vpop.f32.mrb[0].mxu0
        %v1526 = vadd.f32 %v1351, %v1525
        %v1527 = vpop.f32.mrb[0].mxu0
        %v1528 = vpop.f32.mrb[0].mxu0
        %v1529 = vadd.f32 %v1356, %v1528
        %v1530 = vpop.f32.mrb[0].mxu0
        %1531 = vmatprep.mubr.bf16.mxu0 0
        %1532 = vmatmul.mubr.bf16.gmra.mrb[0].mxu0 %v1466
        %v1533 = vpop.f32.mrb[0].mxu0
        %v1534 = vadd.f32 %v1361, %v1533
        %v1535 = vpop.f32.mrb[0].mxu0
        %v1536 = vpop.f32.mrb[0].mxu0
        %v1537 = vadd.f32 %v1366, %v1536
        %v1538 = vpop.f32.mrb[0].mxu0
        %1539 = vmatprep.mubr.bf16.mxu0 0
        %1540 = vmatmul.mubr.bf16.gmra.mrb[0].mxu0 %v1469
        %v1541 = vpop.f32.mrb[0].mxu0
        %v1542 = vadd.f32 %v1371, %v1541
        %v1543 = vpop.f32.mrb[0].mxu0
        %v1544 = vpop.f32.mrb[0].mxu0
        %v1545 = vadd.f32 %v1376, %v1544
        %v1546 = vpop.f32.mrb[0].mxu0
        %1547 = vmatprep.mubr.bf16.mxu0 0
        %1548 = vmatmul.mubr.bf16.gmra.mrb[0].mxu0 %v1472
        %v1549 = vpop.f32.mrb[0].mxu0
        %v1550 = vadd.f32 %v1381, %v1549
        %v1551 = vpop.f32.mrb[0].mxu0
        %v1552 = vpop.f32.mrb[0].mxu0
        %v1553 = vadd.f32 %v1386, %v1552
        %v1554 = vpop.f32.mrb[0].mxu0
        %1555 = vmatprep.mubr.bf16.mxu0 0
        %1556 = vmatmul.mubr.bf16.gmra.mrb[0].mxu0 %v1475
        %v1557 = vpop.f32.mrb[0].mxu0
        %v1558 = vadd.f32 %v1391, %v1557
        %v1559 = vpop.f32.mrb[0].mxu0
        %v1560 = vpop.f32.mrb[0].mxu0
        %v1561 = vadd.f32 %v1396, %v1560
        %v1562 = vpop.f32.mrb[0].mxu0
        %1563 = vmatprep.mubr.bf16.mxu0 0
        %1564 = vmatmul.mubr.bf16.gmra.mrb[0].mxu0 %v1478
        %v1565 = vpop.f32.mrb[0].mxu0
        %v1566 = vadd.f32 %v1401, %v1565
        %v1567 = vpop.f32.mrb[0].mxu0
        %v1568 = vpop.f32.mrb[0].mxu0
        %v1569 = vadd.f32 %v1406, %v1568
        %v1570 = vpop.f32.mrb[0].mxu0
        %1571 = vmatprep.mubr.bf16.mxu0 0
        %1572 = vmatmul.mubr.bf16.gmra.mrb[0].mxu0 %v1481
        %v1573 = vpop.f32.mrb[0].mxu0
        %v1574 = vadd.f32 %v1411, %v1573
        %v1575 = vpop.f32.mrb[0].mxu0
        %v1576 = vpop.f32.mrb[0].mxu0
        %v1577 = vadd.f32 %v1416, %v1576
        %v1578 = vpop.f32.mrb[0].mxu0
        %1579 = vdwg.mxu0
        %v1580 = vmul.f32 %v1518, 0.5
        %v1581 = vmul.f32 %v1521, 0.5
        %v1582 = vmul.f32 %v1526, 0.5
        %v1583 = vmul.f32 %v1529, 0.5
        %v1584 = vmul.f32 %v1534, 0.5
        %v1585 = vmul.f32 %v1537, 0.5
        %v1586 = vmul.f32 %v1542, 0.5
        %v1587 = vmul.f32 %v1545, 0.5
        %v1588 = vmul.f32 %v1550, 0.5
        %v1589 = vmul.f32 %v1553, 0.5
        %v1590 = vmul.f32 %v1558, 0.5
        %v1591 = vmul.f32 %v1561, 0.5
        %v1592 = vmul.f32 %v1566, 0.5
        %v1593 = vmul.f32 %v1569, 0.5
        %v1594 = vmul.f32 %v1574, 0.5
        %v1595 = vmul.f32 %v1577, 0.5
        %v1596 = vmul.f32 %v1518, 0.044715
        %v1597 = vmul.f32 %v1521, 0.044715
        %v1598 = vmul.f32 %v1526, 0.044715
        %v1599 = vmul.f32 %v1529, 0.044715
        %v1600 = vmul.f32 %v1534, 0.044715
        %v1601 = vmul.f32 %v1537, 0.044715
        %v1602 = vmul.f32 %v1542, 0.044715
        %v1603 = vmul.f32 %v1545, 0.044715
        %v1604 = vmul.f32 %v1550, 0.044715
        %v1605 = vmul.f32 %v1553, 0.044715
        %v1606 = vmul.f32 %v1558, 0.044715
        %v1607 = vmul.f32 %v1561, 0.044715
        %v1608 = vmul.f32 %v1566, 0.044715
        %v1609 = vmul.f32 %v1569, 0.044715
        %v1610 = vmul.f32 %v1574, 0.044715
        %v1611 = vmul.f32 %v1577, 0.044715
        %v1612 = vmul.f32 %v1596, %v1518
        %v1613 = vmul.f32 %v1597, %v1521
        %v1614 = vmul.f32 %v1598, %v1526
        %v1615 = vmul.f32 %v1599, %v1529
        %v1616 = vmul.f32 %v1600, %v1534
        %v1617 = vmul.f32 %v1601, %v1537
        %v1618 = vmul.f32 %v1602, %v1542
        %v1619 = vmul.f32 %v1603, %v1545
        %v1620 = vmul.f32 %v1604, %v1550
        %v1621 = vmul.f32 %v1605, %v1553
        %v1622 = vmul.f32 %v1606, %v1558
        %v1623 = vmul.f32 %v1607, %v1561
        %v1624 = vmul.f32 %v1608, %v1566
        %v1625 = vmul.f32 %v1609, %v1569
        %v1626 = vmul.f32 %v1610, %v1574
        %v1627 = vmul.f32 %v1611, %v1577
        %v1628 = vmul.f32 %v1612, %v1518
        %v1629 = vmul.f32 %v1613, %v1521
        %v1630 = vmul.f32 %v1614, %v1526
        %v1631 = vmul.f32 %v1615, %v1529
        %v1632 = vmul.f32 %v1616, %v1534
        %v1633 = vmul.f32 %v1617, %v1537
        %v1634 = vmul.f32 %v1618, %v1542
        %v1635 = vmul.f32 %v1619, %v1545
        %v1636 = vmul.f32 %v1620, %v1550
        %v1637 = vmul.f32 %v1621, %v1553
        %v1638 = vmul.f32 %v1622, %v1558
        %v1639 = vmul.f32 %v1623, %v1561
        %v1640 = vmul.f32 %v1624, %v1566
        %v1641 = vmul.f32 %v1625, %v1569
        %v1642 = vmul.f32 %v1626, %v1574
        %v1643 = vmul.f32 %v1627, %v1577
        %v1644 = vadd.f32 %v1518, %v1628
        %v1645 = vadd.f32 %v1521, %v1629
        %v1646 = vadd.f32 %v1526, %v1630
        %v1647 = vadd.f32 %v1529, %v1631
        %v1648 = vadd.f32 %v1534, %v1632
        %v1649 = vadd.f32 %v1537, %v1633
        %v1650 = vadd.f32 %v1542, %v1634
        %v1651 = vadd.f32 %v1545, %v1635
        %v1652 = vadd.f32 %v1550, %v1636
        %v1653 = vadd.f32 %v1553, %v1637
        %v1654 = vadd.f32 %v1558, %v1638
        %v1655 = vadd.f32 %v1561, %v1639
        %v1656 = vadd.f32 %v1566, %v1640
        %v1657 = vadd.f32 %v1569, %v1641
        %v1658 = vadd.f32 %v1574, %v1642
        %v1659 = vadd.f32 %v1577, %v1643
        %v1660 = vmul.f32 %v1644, 0.7978846
        %v1661 = vmul.f32 %v1645, 0.7978846
        %v1662 = vmul.f32 %v1646, 0.7978846
        %v1663 = vmul.f32 %v1647, 0.7978846
        %v1664 = vmul.f32 %v1648, 0.7978846
        %v1665 = vmul.f32 %v1649, 0.7978846
        %v1666 = vmul.f32 %v1650, 0.7978846
        %v1667 = vmul.f32 %v1651, 0.7978846
        %v1668 = vmul.f32 %v1652, 0.7978846
        %v1669 = vmul.f32 %v1653, 0.7978846
        %v1670 = vmul.f32 %v1654, 0.7978846
        %v1671 = vmul.f32 %v1655, 0.7978846
        %v1672 = vmul.f32 %v1656, 0.7978846
        %v1673 = vmul.f32 %v1657, 0.7978846
        %v1674 = vmul.f32 %v1658, 0.7978846
        %v1675 = vmul.f32 %v1659, 0.7978846
        %v1676 = vtanh.pop %v1660
        %v1677 = vtanh.pop %v1661
        %v1678 = vtanh.pop %v1662
        %v1679 = vtanh.pop %v1663
        %v1680 = vtanh.pop %v1664
        %v1681 = vtanh.pop %v1665
        %v1682 = vtanh.pop %v1666
        %v1683 = vtanh.pop %v1667
        %v1684 = vtanh.pop %v1668
        %v1685 = vtanh.pop %v1669
        %v1686 = vtanh.pop %v1670
        %v1687 = vtanh.pop %v1671
        %v1688 = vtanh.pop %v1672
        %v1689 = vtanh.pop %v1673
        %v1690 = vtanh.pop %v1674
        %v1691 = vtanh.pop %v1675
        %v1692 = vadd.f32 %v1676, 1.0
        %v1693 = vadd.f32 %v1677, 1.0
        %v1694 = vadd.f32 %v1678, 1.0
        %v1695 = vadd.f32 %v1679, 1.0
        %v1696 = vadd.f32 %v1680, 1.0
        %v1697 = vadd.f32 %v1681, 1.0
        %v1698 = vadd.f32 %v1682, 1.0
        %v1699 = vadd.f32 %v1683, 1.0
        %v1700 = vadd.f32 %v1684, 1.0
        %v1701 = vadd.f32 %v1685, 1.0
        %v1702 = vadd.f32 %v1686, 1.0
        %v1703 = vadd.f32 %v1687, 1.0
        %v1704 = vadd.f32 %v1688, 1.0
        %v1705 = vadd.f32 %v1689, 1.0
        %v1706 = vadd.f32 %v1690, 1.0
        %v1707 = vadd.f32 %v1691, 1.0
        %v1708 = vmul.f32 %v1580, %v1692
        %v1709 = vmul.f32 %v1581, %v1693
        %v1710 = vmul.f32 %v1582, %v1694
        %v1711 = vmul.f32 %v1583, %v1695
        %v1712 = vmul.f32 %v1584, %v1696
        %v1713 = vmul.f32 %v1585, %v1697
        %v1714 = vmul.f32 %v1586, %v1698
        %v1715 = vmul.f32 %v1587, %v1699
        %v1716 = vmul.f32 %v1588, %v1700
        %v1717 = vmul.f32 %v1589, %v1701
        %v1718 = vmul.f32 %v1590, %v1702
        %v1719 = vmul.f32 %v1591, %v1703
        %v1720 = vmul.f32 %v1592, %v1704
        %v1721 = vmul.f32 %v1593, %v1705
        %v1722 = vmul.f32 %v1594, %v1706
        %v1723 = vmul.f32 %v1595, %v1707
        %v1724 = vld [vmem:[%s7] sm:$0xf]
        %v1725 = vld [vmem:[%s7 + $0x4] sm:$0xf]
        %v1726 = vld [vmem:[%s7 + $0x8] sm:$0xf]
        %v1727 = vld [vmem:[%s7 + $0xc] sm:$0xf]
        %v1728 = vpack.c.bf16 %v1709, %v1708
        %v1729 = vpack.c.bf16 %v1711, %v1710
        %v1730 = vpack.c.bf16 %v1713, %v1712
        %v1731 = vpack.c.bf16 %v1715, %v1714
        %v1732 = vpack.c.bf16 %v1717, %v1716
        %v1733 = vpack.c.bf16 %v1719, %v1718
        %v1734 = vpack.c.bf16 %v1721, %v1720
        %v1735 = vpack.c.bf16 %v1723, %v1722
        %1737 = vset.pattern.permute.xlu0 0
        %1738 = vperm.xlu0 %1737, %v460
        %v1739 = vpop.permute.xlu0 %1738
        %1742 = vset.pattern.permute.xlu0 0
        %1743 = vperm.xlu0 %1742, %v461
        %v1744 = vpop.permute.xlu0 %1743
        %1747 = vset.pattern.permute.xlu0 0
        %1748 = vperm.xlu0 %1747, %v462
        %v1749 = vpop.permute.xlu0 %1748
        %1752 = vset.pattern.permute.xlu0 0
        %1753 = vperm.xlu0 %1752, %v463
        %v1754 = vpop.permute.xlu0 %1753
        %v1760 = vunpack.c.l.b16 %v1724
        %v1761 = vunpack.c.l.b16 %v1725
        %v1762 = vunpack.c.l.b16 %v1726
        %v1763 = vunpack.c.l.b16 %v1727
        %v1764 = vpack.c.b16 %v1761, %v1760
        %v1765 = vpack.c.b16 %v1763, %v1762
        %1768 = vmatprep.subr.bf16.mxu0 0
        %1769 = vmatpush1.bf16.msra.mxu0 %v1728
        %1770 = vmatprep.subr.bf16.mxu0 0
        %1771 = vmatpush1.bf16.msra.mxu0 %v1729
        %1772 = vmatprep.subr.bf16.mxu0 0
        %1773 = vmatpush1.bf16.msra.mxu0 %v1730
        %1774 = vmatprep.subr.bf16.mxu0 0
        %1775 = vmatpush1.bf16.msra.mxu0 %v1731
        %1776 = vmatprep.subr.bf16.mxu0 0
        %1777 = vmatpush1.bf16.msra.mxu0 %v1732
        %1778 = vmatprep.subr.bf16.mxu0 0
        %1779 = vmatpush1.bf16.msra.mxu0 %v1733
        %1780 = vmatprep.subr.bf16.mxu0 0
        %1781 = vmatpush1.bf16.msra.mxu0 %v1734
        %1782 = vmatprep.subr.bf16.mxu0 0
        %1783 = vmatpush1.bf16.msra.mxu0 %v1735
        %1784 = vmatprep.subr.bf16.mxu0 0
        %1785 = vmatpush1.bf16.msra.mxu0 0
        %1786 = vmatprep.subr.bf16.mxu0 0
        %1787 = vmatpush1.bf16.msra.mxu0 0
        %1788 = vmatprep.subr.bf16.mxu0 0
        %1789 = vmatpush1.bf16.msra.mxu0 0
        %1790 = vmatprep.subr.bf16.mxu0 0
        %1791 = vmatpush1.bf16.msra.mxu0 0
        %1792 = vmatprep.subr.bf16.mxu0 0
        %1793 = vmatpush1.bf16.msra.mxu0 0
        %1794 = vmatprep.subr.bf16.mxu0 0
        %1795 = vmatpush1.bf16.msra.mxu0 0
        %1796 = vmatprep.subr.bf16.mxu0 0
        %1797 = vmatpush1.bf16.msra.mxu0 0
        %1798 = vmatprep.subr.bf16.mxu0 0
        %1799 = vmatpush1.bf16.msra.mxu0 0
        %1800 = vmatprep.mubr.bf16.mxu0 0
        %1801 = vmatmul.mubr.bf16.gmra.mrb[0].mxu0 %v1764
        %v1802 = vpop.f32.mrb[0].mxu0
        %v1803 = vadd.f32 %v1739, %v1802
        %v1804 = vpop.f32.mrb[0].mxu0
        %v1805 = vpop.f32.mrb[0].mxu0
        %v1806 = vadd.f32 %v1744, %v1805
        %v1807 = vpop.f32.mrb[0].mxu0
        %1808 = vmatprep.mubr.bf16.mxu0 0
        %1809 = vmatmul.mubr.bf16.gmra.mrb[0].mxu0 %v1765
        %v1810 = vpop.f32.mrb[0].mxu0
        %v1811 = vadd.f32 %v1749, %v1810
        %v1812 = vpop.f32.mrb[0].mxu0
        %v1813 = vpop.f32.mrb[0].mxu0
        %v1814 = vadd.f32 %v1754, %v1813
        %v1815 = vpop.f32.mrb[0].mxu0
        %1816 = vdwg.mxu0
        %v1817 = vadd.f32 %v1803, %v1234
        %v1818 = vadd.f32 %v1806, %v1235
        %v1819 = vadd.f32 %v1811, %v1236
        %v1820 = vadd.f32 %v1814, %v1237
        %1821 = vst [vmem:[%s392] sm:$0xff] %v1817
        %1822 = vst [vmem:[%s392 + $0x8] sm:$0xff] %v1818
        %1823 = vst [vmem:[%s392 + $0x10] sm:$0xff] %v1819
        %1824 = vst [vmem:[%s392 + $0x18] sm:$0xff] %v1820
        %s1825 = sand.u32 %s221, 1
        %s1826 = sand.u32 %s221, 1
        %s1827 = smul.addr %s1826, 32
        %s1828 = scalar_lea.vmem [#allocation5], %s1827
        // Predicated region
        $region91: #{swin_afno_block_pallas.1} parent=85 // pred_check
          %p1829 = pneg %p231
        $region92: #{swin_afno_block_pallas.1} parent=85 // pred_check_branch
          %1831 = sbr.rel (%p1829) target = $region94
        $region93: #{swin_afno_block_pallas.1} parent=85 // pred_region
          %s1832 = smul.addr %s26, 8
          %s1833 = scalar_lea.vmem %s9, %s1832
          // Predicated region
          $region95: #{swin_afno_block_pallas.1} parent=93 // pred_check
            _
          $region96: #{swin_afno_block_pallas.1} parent=93 // pred_check_branch
            %1835 = sbr.rel (0) target = $region98
          $region97: #{swin_afno_block_pallas.1} parent=93 // pred_region
            // Predicated region
            $region99: #{swin_afno_block_pallas.1} parent=97 // pred_check
              _
            $region100: #{swin_afno_block_pallas.1} parent=97 // pred_check_branch
              %1837 = sbr.rel (0) target = $region102
            $region101: #{swin_afno_block_pallas.1} parent=97 // pred_region
              // Predicated region
              $region114: #{swin_afno_block_pallas.1} parent=101 // pred_check
                _
              $region115: #{swin_afno_block_pallas.1} parent=101 // pred_check_branch
                %1858 = sbr.rel (0) target = $region117
              $region116: #{swin_afno_block_pallas.1} parent=101 // pred_region
                loop: start=0, step=1, limit=1
                $region118: #{swin_afno_block_pallas.1} parent=116 // loop_pre_header
                  _
                $region119: #{swin_afno_block_pallas.1} parent=116 // loop_header
                  %s1860 = sphi 0, %s1864
                  %p1861 = scmp.ge.s32.totalorder %s1860, 1
                  %s1865 = sphi %s1828, %s1828
                  %s1866 = sphi %s1833, %s1833
                $region120: #{swin_afno_block_pallas.1} parent=116 // loop_header_branch
                  %1863 = sbr.rel (%p1861) target = $region124
                $region121: #{swin_afno_block_pallas.1} parent=116 // loop_body
                  %v1867 = vld [vmem:[%s1865] sm:$0xff]
                  %1868 = vst [vmem:[%s1866] sm:$0xff] %v1867
                  %v1869 = vld [vmem:[%s1865 + $0x8] sm:$0xff]
                  %1870 = vst [vmem:[%s1866 + $0x20] sm:$0xff] %v1869
                  %v1871 = vld [vmem:[%s1865 + $0x10] sm:$0xff]
                  %1872 = vst [vmem:[%s1866 + $0x40] sm:$0xff] %v1871
                  %v1873 = vld [vmem:[%s1865 + $0x18] sm:$0xff]
                  %1874 = vst [vmem:[%s1866 + $0x60] sm:$0xff] %v1873
                $region122: #{swin_afno_block_pallas.1} parent=116 // loop_footer
                  %s1864 = sadd.s32 1, %s1860
                $region123: #{swin_afno_block_pallas.1} parent=116 // loop_footer_branch
                  %1859 = sbr.rel target = $region119
                $region124: #{swin_afno_block_pallas.1} parent=116 // loop_exit
                  _
              $region117: #{swin_afno_block_pallas.1} parent=101 // pred_fallthru
                _
              // Predicated region
              $region125: #{swin_afno_block_pallas.1} parent=101 // pred_check
                _
              $region126: #{swin_afno_block_pallas.1} parent=101 // pred_check_branch
                %1876 = sbr.rel target = $region128
              $region127: #{swin_afno_block_pallas.1} parent=101 // pred_region
                _
              $region128: #{swin_afno_block_pallas.1} parent=101 // pred_fallthru
                _
            $region102: #{swin_afno_block_pallas.1} parent=97 // pred_fallthru
              _
            // Predicated region
            $region103: #{swin_afno_block_pallas.1} parent=97 // pred_check
              _
            $region104: #{swin_afno_block_pallas.1} parent=97 // pred_check_branch
              %1839 = sbr.rel target = $region106
            $region105: #{swin_afno_block_pallas.1} parent=97 // pred_region
              loop: start=0, step=1, limit=1
              $region107: #{swin_afno_block_pallas.1} parent=105 // loop_pre_header
                _
              $region108: #{swin_afno_block_pallas.1} parent=105 // loop_header
                %s1842 = sphi 0, %s1846
                %p1843 = scmp.ge.s32.totalorder %s1842, 1
                %s1847 = sphi %s1828, %s1828
                %s1848 = sphi %s1833, %s1833
              $region109: #{swin_afno_block_pallas.1} parent=105 // loop_header_branch
                %1845 = sbr.rel (%p1843) target = $region113
              $region110: #{swin_afno_block_pallas.1} parent=105 // loop_body
                %v1849 = vld [vmem:[%s1847] sm:$0xff]
                %1850 = vst [vmem:[%s1848] sm:$0xff] %v1849
                %v1851 = vld [vmem:[%s1847 + $0x8] sm:$0xff]
                %1852 = vst [vmem:[%s1848 + $0x20] sm:$0xff] %v1851
                %v1853 = vld [vmem:[%s1847 + $0x10] sm:$0xff]
                %1854 = vst [vmem:[%s1848 + $0x40] sm:$0xff] %v1853
                %v1855 = vld [vmem:[%s1847 + $0x18] sm:$0xff]
                %1856 = vst [vmem:[%s1848 + $0x60] sm:$0xff] %v1855
              $region111: #{swin_afno_block_pallas.1} parent=105 // loop_footer
                %s1846 = sadd.s32 1, %s1842
              $region112: #{swin_afno_block_pallas.1} parent=105 // loop_footer_branch
                %1841 = sbr.rel target = $region108
              $region113: #{swin_afno_block_pallas.1} parent=105 // loop_exit
                _
            $region106: #{swin_afno_block_pallas.1} parent=97 // pred_fallthru
              _
          $region98: #{swin_afno_block_pallas.1} parent=93 // pred_fallthru
            _
          %1877 = vnop
        $region94: #{swin_afno_block_pallas.1} parent=85 // pred_fallthru
          _
      $region86: #{swin_afno_block_pallas.1} parent=5 // pred_fallthru
        _
      %p1878 = scmp.le.s32.totalorder 2, %s21
      // Predicated region
      $region129: #{swin_afno_block_pallas.1} parent=5 // pred_check
        %p1879 = pneg %p1878
      $region130: #{swin_afno_block_pallas.1} parent=5 // pred_check_branch
        %1881 = sbr.rel (%p1879) target = $region132
      $region131: #{swin_afno_block_pallas.1} parent=5 // pred_region
        %s1882 = ssub.s32 %s21, 2
        // Predicated region
        $region133: #{swin_afno_block_pallas.1} parent=131 // pred_check
          %p1883 = pneg %p237
        $region134: #{swin_afno_block_pallas.1} parent=131 // pred_check_branch
          %1885 = sbr.rel (%p1883) target = $region136
        $region135: #{swin_afno_block_pallas.1} parent=131 // pred_region
          %s1886 = sand.u32 %s222, 1
          %s1887 = sand.u32 %s222, 1
          %s1888 = smul.addr %s1887, 32
          %s1889 = scalar_lea.vmem [#allocation5], %s1888
        $region136: #{swin_afno_block_pallas.1} parent=131 // pred_fallthru
          _
      $region132: #{swin_afno_block_pallas.1} parent=5 // pred_fallthru
        _
    $region6: #{swin_afno_block_pallas.1} parent=1 // loop_footer
      %s25 = sadd.s32 1, %s21
    $region7: #{swin_afno_block_pallas.1} parent=1 // loop_footer_branch
      %20 = sbr.rel target = $region3
    $region8: #{swin_afno_block_pallas.1} parent=1 // loop_exit
      _

</llo_original>
